<compile_context>
chip_gen: v5e
topology: v5e:2x2
jax: 0.10.0
libtpu: 0.0.40
codegen_flags: <defaults>
</compile_context>

<pallas_src>
import jax
import jax.numpy as jnp
from jax.experimental import pallas as pl
from jax.experimental.pallas import tpu as pltpu


def _make_patcher_kernel(c_in, c_mid, seq_len, nb):
    """Kernel body. `nb` batch elements per grid step, lane-folded to (C, nb*T)."""
    eps = 1e-5
    n_lanes = nb * seq_len

    def silu(v):
        # exp + reciprocal issue on the EUP slot; no f32 VALU divide.
        return v * pl.reciprocal(1.0 + jnp.exp(-v), approx=False)

    def kernel(x_ref, aff_ref, gn1w_ref, gn1b_ref, wblk_ref, bblk_ref,
               w2_ref, b2_ref, o_ref, stk1_ref, stk2_ref):
        # ---- hoisted masks: built once, reused by both GroupNorms and convs ----
        col = jax.lax.broadcasted_iota(jnp.int32, (1, n_lanes), 1)
        first_mask = col == 0                       # t == 0 within each segment
        last_mask = col == seq_len - 1              # t == T-1 within each segment
        for n in range(1, nb):
            first_mask = first_mask | (col == n * seq_len)
            last_mask = last_mask | (col == (n + 1) * seq_len - 1)
        seg_masks = [(col >= n * seq_len) & (col < (n + 1) * seq_len)
                     for n in range(nb)]

        def gn_stats(h, inv_n):
            # Single pass: sum and sum-of-squares, var = E[x^2] - mean^2,
            # segmented per batch element (each segment = T contiguous lanes).
            s1 = jnp.sum(h, axis=0, keepdims=True)          # (1, nb*T)
            s2 = jnp.sum(h * h, axis=0, keepdims=True)      # (1, nb*T)
            means, istds = [], []
            for mask in seg_masks:
                m = jnp.sum(jnp.where(mask, s1, 0.0), axis=1, keepdims=True) * inv_n
                e2 = jnp.sum(jnp.where(mask, s2, 0.0), axis=1, keepdims=True) * inv_n
                means.append(m)                                      # (1, 1)
                istds.append(jax.lax.rsqrt(e2 - m * m + eps))        # (1, 1)
            return means, istds

        def seg_affine(ws, bs, means, istds):
            # Fold (h - mean) * istd * w + b into a single FMA  h * Wf + Bf,
            # with per-batch-segment coefficients selected on lanes.
            wf = ws[0] * istds[0]
            bf = bs[0] - means[0] * istds[0] * ws[0]
            for n in range(1, nb):
                wn = ws[n] * istds[n]
                bn = bs[n] - means[n] * istds[n] * ws[n]
                wf = jnp.where(seg_masks[n], wn, wf)
                bf = jnp.where(seg_masks[n], bn, bf)
            return wf, bf

        def write_taps(a, dst_ref, c):
            # Sublane-stack the 3 conv taps (zero-padded, periodic per segment).
            dst_ref[0:c, :] = jnp.where(first_mask, 0.0,
                                        pltpu.roll(a, shift=1, axis=1))
            dst_ref[c:2 * c, :] = a
            dst_ref[2 * c:3 * c, :] = jnp.where(
                last_mask, 0.0, pltpu.roll(a, shift=n_lanes - 1, axis=1))

        x = x_ref[...].astype(jnp.float32)                  # (Cin, nb*T)

        # ---- block1: GroupNorm(1) -> SiLU -> Conv1d(k=3), fused with the
        #      to_out 1x1 residual via one block-diagonal MXU matmul ----
        g1w = gn1w_ref[...]
        g1b = gn1b_ref[...]
        means1, istds1 = gn_stats(x, 1.0 / (c_in * seq_len))
        w1f, b1f = seg_affine([g1w] * nb, [g1b] * nb, means1, istds1)
        a1 = silu(x * w1f + b1f)
        write_taps(a1, stk1_ref, c_in)
        stk1_ref[3 * c_in:, :] = x                          # residual input rows
        fused = jnp.dot(wblk_ref[...], stk1_ref[...],
                        preferred_element_type=jnp.float32) + bblk_ref[...]
        h = fused[0:c_mid, :]                               # conv1 output (+ b1)
        res = fused[c_mid:, :]                              # 1x1 residual (+ b_res)

        # ---- block2: GroupNorm(1) -> *(scale+1)+shift -> SiLU -> Conv1d(k=3) ----
        # aff_ref carries the pre-fused per-(batch, channel) affine:
        #   rows [:Cm]  = gn2_w * (scale + 1)
        #   rows [Cm:]  = gn2_b * (scale + 1) + shift
        means2, istds2 = gn_stats(h, 1.0 / (c_mid * seq_len))
        ws2 = [aff_ref[n, 0:c_mid, :] for n in range(nb)]
        bs2 = [aff_ref[n, c_mid:, :] for n in range(nb)]
        w2f, b2f = seg_affine(ws2, bs2, means2, istds2)
        a2 = silu(h * w2f + b2f)
        write_taps(a2, stk2_ref, c_mid)
        out = jnp.dot(w2_ref[...], stk2_ref[...],
                      preferred_element_type=jnp.float32) + b2_ref[...] + res

        o_ref[...] = out.astype(o_ref.dtype)

    return kernel


def patcher_forward(x, mapping, params, patch_size, batch_per_step=None):
    """Pallas Patcher.forward: x (B, Cin, T), mapping (B, F) -> (B, Cm*p, T//p)."""
    gn1_w, gn1_b, w1, b1, ss_w, ss_b, gn2_w, gn2_b, w2, b2, w_res, b_res = params
    B, c_in, T = x.shape
    c_mid = w1.shape[0]
    assert T % patch_size == 0

    # Fold nb batch elements onto the lane axis (nb*T lanes fills a 256-wide
    # MXU RHS on v6e/v7x) while keeping >= 2 parallel grid steps when possible.
    nb = batch_per_step if batch_per_step is not None else (2 if B % 2 == 0 else 1)
    assert B % nb == 0
    n_lanes = nb * T
    f32 = jnp.float32
    hp = jax.lax.Precision.HIGHEST

    # -- tiny one-time parameter prep on the XLA side --
    # MappingToScaleShift + GroupNorm2 affine folded into per-(batch, channel)
    # effective scale/bias (B x 2*Cm scalars).
    m32 = mapping.astype(f32)
    ss = jnp.einsum('bf,cf->bc', m32 * jax.nn.sigmoid(m32), ss_w.astype(f32),
                    precision=hp) + ss_b.astype(f32)
    scale1 = ss[:, :c_mid] + 1.0
    shift = ss[:, c_mid:]
    w_eff = gn2_w.astype(f32)[None, :] * scale1
    b_eff = gn2_b.astype(f32)[None, :] * scale1 + shift
    aff = jnp.concatenate([w_eff, b_eff], axis=1).reshape(B, 2 * c_mid, 1)

    # conv1 taps + 1x1 residual fused into one block-diagonal MXU weight.
    w1_taps = jnp.transpose(w1.astype(f32), (0, 2, 1)).reshape(c_mid, 3 * c_in)
    w_blk = jnp.zeros((2 * c_mid, 4 * c_in), f32)
    w_blk = w_blk.at[:c_mid, :3 * c_in].set(w1_taps)
    w_blk = w_blk.at[c_mid:, 3 * c_in:].set(w_res.astype(f32))
    b_blk = jnp.concatenate([b1, b_res]).astype(f32).reshape(2 * c_mid, 1)
    w2_taps = jnp.transpose(w2.astype(f32), (0, 2, 1)).reshape(c_mid, 3 * c_mid)

    # Batch folded onto lanes: (B, Cin, T) -> (Cin, B*T).
    x_t = jnp.transpose(x, (1, 0, 2)).reshape(c_in, B * T)

    kernel = _make_patcher_kernel(c_in, c_mid, T, nb)

    h = pl.pallas_call(
        kernel,
        grid=(B // nb,),
        out_shape=jax.ShapeDtypeStruct((c_mid, B * T), x.dtype),
        in_specs=[
            pl.BlockSpec((c_in, n_lanes), lambda i: (0, i)),        # x (lane-folded)
            pl.BlockSpec((nb, 2 * c_mid, 1), lambda i: (i, 0, 0)),  # fused GN2 affine
            pl.BlockSpec((c_in, 1), lambda i: (0, 0)),              # gn1 weight
            pl.BlockSpec((c_in, 1), lambda i: (0, 0)),              # gn1 bias
            pl.BlockSpec((2 * c_mid, 4 * c_in), lambda i: (0, 0)),  # conv1+res block-diag
            pl.BlockSpec((2 * c_mid, 1), lambda i: (0, 0)),         # [b1; b_res]
            pl.BlockSpec((c_mid, 3 * c_mid), lambda i: (0, 0)),     # conv2 taps
            pl.BlockSpec((c_mid, 1), lambda i: (0, 0)),             # conv2 bias
        ],
        out_specs=pl.BlockSpec((c_mid, n_lanes), lambda i: (0, i)),
        scratch_shapes=[
            pltpu.VMEM((4 * c_in, n_lanes), jnp.float32),           # conv1 tap stack + x
            pltpu.VMEM((3 * c_mid, n_lanes), jnp.float32),          # conv2 tap stack
        ],
        compiler_params=pltpu.CompilerParams(
            dimension_semantics=("parallel",)),
    )(x_t, aff,
      gn1_w.astype(f32).reshape(c_in, 1), gn1_b.astype(f32).reshape(c_in, 1),
      w_blk, b_blk, w2_taps, b2.astype(f32).reshape(c_mid, 1))

    # Unfold batch + Patcher rearrange 'b c (l p) -> b (c p) l' (pure layout,
    # kept outside the kernel so kernel stores stay lane-dense).
    L = T // patch_size
    return (h.reshape(c_mid, B, L, patch_size)
             .transpose(1, 0, 3, 2)
             .reshape(B, c_mid * patch_size, L))


def patcher_ref(x, mapping, params, patch_size):
    """Pure-JAX reference mirroring the PyTorch Patcher forward."""
    gn1_w, gn1_b, w1, b1, ss_w, ss_b, gn2_w, gn2_b, w2, b2, w_res, b_res = params
    eps = 1e-5
    hp = jax.lax.Precision.HIGHEST

    def group_norm(h, w, b):
        mean = jnp.mean(h, axis=(1, 2), keepdims=True)
        var = jnp.mean((h - mean) ** 2, axis=(1, 2), keepdims=True)
        return ((h - mean) * jax.lax.rsqrt(var + eps)
                * w[None, :, None] + b[None, :, None])

    def silu(v):
        return v * jax.nn.sigmoid(v)

    def conv3(h, w, b):  # w: (Co, Ci, 3), PyTorch layout
        h_prev = jnp.pad(h, ((0, 0), (0, 0), (1, 0)))[:, :, :-1]
        h_next = jnp.pad(h, ((0, 0), (0, 0), (0, 1)))[:, :, 1:]
        y = (jnp.einsum('oi,bit->bot', w[:, :, 0], h_prev, precision=hp)
             + jnp.einsum('oi,bit->bot', w[:, :, 1], h, precision=hp)
             + jnp.einsum('oi,bit->bot', w[:, :, 2], h_next, precision=hp))
        return y + b[None, :, None]

    h = conv3(silu(group_norm(x, gn1_w, gn1_b)), w1, b1)

    ss = silu(mapping) @ ss_w.T + ss_b
    scale, shift = jnp.split(ss, 2, axis=1)

    h2 = group_norm(h, gn2_w, gn2_b)
    h2 = h2 * (scale[:, :, None] + 1.0) + shift[:, :, None]
    h2 = conv3(silu(h2), w2, b2)

    out = h2 + (jnp.einsum('oi,bit->bot', w_res, x, precision=hp)
                + b_res[None, :, None])

    B, C, T = out.shape
    L = T // patch_size
    return out.reshape(B, C, L, patch_size).transpose(0, 1, 3, 2).reshape(
        B, C * patch_size, L)


if __name__ == "__main__":
    B, Cin, T = 4, 8, 128
    out_channels, patch_size = 64, 4
    Cm = out_channels // patch_size          # 16
    F = 16                                   # context_mapping_features

    key = jax.random.PRNGKey(0)
    ks = jax.random.split(key, 16)

    x = jax.random.normal(ks[0], (B, Cin, T), dtype=jnp.float32)
    mapping = jax.random.normal(ks[1], (B, F), dtype=jnp.float32)

    gn1_w = 1.0 + 0.1 * jax.random.normal(ks[2], (Cin,), jnp.float32)
    gn1_b = 0.1 * jax.random.normal(ks[3], (Cin,), jnp.float32)
    w1 = 0.2 * jax.random.normal(ks[4], (Cm, Cin, 3), jnp.float32)
    b1 = 0.1 * jax.random.normal(ks[5], (Cm,), jnp.float32)
    ss_w = 0.2 * jax.random.normal(ks[6], (2 * Cm, F), jnp.float32)
    ss_b = 0.1 * jax.random.normal(ks[7], (2 * Cm,), jnp.float32)
    gn2_w = 1.0 + 0.1 * jax.random.normal(ks[8], (Cm,), jnp.float32)
    gn2_b = 0.1 * jax.random.normal(ks[9], (Cm,), jnp.float32)
    w2 = 0.2 * jax.random.normal(ks[10], (Cm, Cm, 3), jnp.float32)
    b2 = 0.1 * jax.random.normal(ks[11], (Cm,), jnp.float32)
    w_res = 0.2 * jax.random.normal(ks[12], (Cm, Cin), jnp.float32)
    b_res = 0.1 * jax.random.normal(ks[13], (Cm,), jnp.float32)

    params = (gn1_w, gn1_b, w1, b1, ss_w, ss_b,
              gn2_w, gn2_b, w2, b2, w_res, b_res)

    out = patcher_forward(x, mapping, params, patch_size)
    out = jax.block_until_ready(out)

    ref = patcher_ref(x, mapping, params, patch_size)
    assert out.shape == (B, out_channels, T // patch_size), out.shape
    err = float(jnp.max(jnp.abs(out - ref)))
    assert jnp.allclose(out, ref, atol=5e-3, rtol=5e-3), f"max abs err {err}"
    assert bool(jnp.all(jnp.isfinite(out)))
    print("KERNEL_OK")
</pallas_src>

<mosaic_0001>
module attributes {stable_mosaic.version = 11 : i64} {
  func.func @kernel(%arg0: i32, %arg1: memref<8x256xf32, #tpu.memory_space<vmem>>, %arg2: memref<2x32x1xf32, #tpu.memory_space<vmem>>, %arg3: memref<8x1xf32, #tpu.memory_space<vmem>>, %arg4: memref<8x1xf32, #tpu.memory_space<vmem>>, %arg5: memref<32x32xf32, #tpu.memory_space<vmem>>, %arg6: memref<32x1xf32, #tpu.memory_space<vmem>>, %arg7: memref<16x48xf32, #tpu.memory_space<vmem>>, %arg8: memref<16x1xf32, #tpu.memory_space<vmem>>, %arg9: memref<16x256xf32, #tpu.memory_space<vmem>>, %arg10: memref<32x256xf32, #tpu.memory_space<vmem>>, %arg11: memref<48x256xf32, #tpu.memory_space<vmem>>) attributes {dimension_semantics = [#tpu.dimension_semantics<parallel>], iteration_bounds = array<i64: 2>, scalar_prefetch = 0 : i64, scratch_operands = 2 : i64, tpu.core_type = #tpu.core_type<tc>, window_params = [{transform_indices = @transform_0, window_bounds = array<i64: 8, 256>}, {transform_indices = @transform_1, window_bounds = array<i64: 2, 32, 1>}, {pipeline_mode = #tpu.pipeline_mode<synchronous>, transform_indices = @transform_2, window_bounds = array<i64: 8, 1>}, {pipeline_mode = #tpu.pipeline_mode<synchronous>, transform_indices = @transform_3, window_bounds = array<i64: 8, 1>}, {pipeline_mode = #tpu.pipeline_mode<synchronous>, transform_indices = @transform_4, window_bounds = array<i64: 32, 32>}, {pipeline_mode = #tpu.pipeline_mode<synchronous>, transform_indices = @transform_5, window_bounds = array<i64: 32, 1>}, {pipeline_mode = #tpu.pipeline_mode<synchronous>, transform_indices = @transform_6, window_bounds = array<i64: 16, 48>}, {pipeline_mode = #tpu.pipeline_mode<synchronous>, transform_indices = @transform_7, window_bounds = array<i64: 16, 1>}, {transform_indices = @transform_8, window_bounds = array<i64: 16, 256>}]} {
    %0 = tpu.iota {dimensions = array<i32: 1>} : vector<1x256xi32>
    %c0_i32 = arith.constant 0 : i32
    %1 = vector.broadcast %c0_i32 : i32 to vector<1x256xi32>
    %2 = arith.cmpi eq, %0, %1 : vector<1x256xi32>
    %c127_i32 = arith.constant 127 : i32
    %3 = vector.broadcast %c127_i32 : i32 to vector<1x256xi32>
    %4 = arith.cmpi eq, %0, %3 : vector<1x256xi32>
    %c128_i32 = arith.constant 128 : i32
    %5 = vector.broadcast %c128_i32 : i32 to vector<1x256xi32>
    %6 = arith.cmpi eq, %0, %5 : vector<1x256xi32>
    %7 = arith.ori %2, %6 : vector<1x256xi1>
    %c255_i32 = arith.constant 255 : i32
    %8 = vector.broadcast %c255_i32 : i32 to vector<1x256xi32>
    %9 = arith.cmpi eq, %0, %8 : vector<1x256xi32>
    %10 = arith.ori %4, %9 : vector<1x256xi1>
    %c0_i32_0 = arith.constant 0 : i32
    %11 = vector.broadcast %c0_i32_0 : i32 to vector<1x256xi32>
    %12 = arith.cmpi sge, %0, %11 : vector<1x256xi32>
    %c128_i32_1 = arith.constant 128 : i32
    %13 = vector.broadcast %c128_i32_1 : i32 to vector<1x256xi32>
    %14 = arith.cmpi slt, %0, %13 : vector<1x256xi32>
    %15 = arith.andi %12, %14 : vector<1x256xi1>
    %c128_i32_2 = arith.constant 128 : i32
    %16 = vector.broadcast %c128_i32_2 : i32 to vector<1x256xi32>
    %17 = arith.cmpi sge, %0, %16 : vector<1x256xi32>
    %c256_i32 = arith.constant 256 : i32
    %18 = vector.broadcast %c256_i32 : i32 to vector<1x256xi32>
    %19 = arith.cmpi slt, %0, %18 : vector<1x256xi32>
    %20 = arith.andi %17, %19 : vector<1x256xi1>
    %c0 = arith.constant 0 : index
    %c0_3 = arith.constant 0 : index
    %21 = vector.load %arg1[%c0, %c0_3] : memref<8x256xf32, #tpu.memory_space<vmem>>, vector<8x256xf32>
    %c0_4 = arith.constant 0 : index
    %c0_5 = arith.constant 0 : index
    %22 = vector.load %arg3[%c0_4, %c0_5] : memref<8x1xf32, #tpu.memory_space<vmem>>, vector<8x1xf32>
    %c0_6 = arith.constant 0 : index
    %c0_7 = arith.constant 0 : index
    %23 = vector.load %arg4[%c0_6, %c0_7] : memref<8x1xf32, #tpu.memory_space<vmem>>, vector<8x1xf32>
    %cst = arith.constant dense<0.000000e+00> : vector<256xf32>
    %24 = vector.multi_reduction <add>, %21, %cst [0] : vector<8x256xf32> to vector<256xf32>
    %25 = vector.shape_cast %24 : vector<256xf32> to vector<1x256xf32>
    %26 = arith.mulf %21, %21 : vector<8x256xf32>
    %cst_8 = arith.constant dense<0.000000e+00> : vector<256xf32>
    %27 = vector.multi_reduction <add>, %26, %cst_8 [0] : vector<8x256xf32> to vector<256xf32>
    %28 = vector.shape_cast %27 : vector<256xf32> to vector<1x256xf32>
    %cst_9 = arith.constant 0.000000e+00 : f32
    %29 = vector.broadcast %cst_9 : f32 to vector<1x256xf32>
    %30 = arith.select %15, %25, %29 : vector<1x256xi1>, vector<1x256xf32>
    %cst_10 = arith.constant dense<0.000000e+00> : vector<1xf32>
    %31 = vector.multi_reduction <add>, %30, %cst_10 [1] : vector<1x256xf32> to vector<1xf32>
    %32 = vector.shape_cast %31 : vector<1xf32> to vector<1x1xf32>
    %cst_11 = arith.constant 9.765625E-4 : f32
    %33 = vector.broadcast %cst_11 : f32 to vector<1x1xf32>
    %34 = arith.mulf %32, %33 : vector<1x1xf32>
    %cst_12 = arith.constant 0.000000e+00 : f32
    %35 = vector.broadcast %cst_12 : f32 to vector<1x256xf32>
    %36 = arith.select %15, %28, %35 : vector<1x256xi1>, vector<1x256xf32>
    %cst_13 = arith.constant dense<0.000000e+00> : vector<1xf32>
    %37 = vector.multi_reduction <add>, %36, %cst_13 [1] : vector<1x256xf32> to vector<1xf32>
    %38 = vector.shape_cast %37 : vector<1xf32> to vector<1x1xf32>
    %cst_14 = arith.constant 9.765625E-4 : f32
    %39 = vector.broadcast %cst_14 : f32 to vector<1x1xf32>
    %40 = arith.mulf %38, %39 : vector<1x1xf32>
    %41 = arith.mulf %34, %34 : vector<1x1xf32>
    %42 = arith.subf %40, %41 : vector<1x1xf32>
    %cst_15 = arith.constant 9.99999974E-6 : f32
    %43 = vector.broadcast %cst_15 : f32 to vector<1x1xf32>
    %44 = arith.addf %42, %43 : vector<1x1xf32>
    %45 = math.rsqrt %44 : vector<1x1xf32>
    %cst_16 = arith.constant 0.000000e+00 : f32
    %46 = vector.broadcast %cst_16 : f32 to vector<1x256xf32>
    %47 = arith.select %20, %25, %46 : vector<1x256xi1>, vector<1x256xf32>
    %cst_17 = arith.constant dense<0.000000e+00> : vector<1xf32>
    %48 = vector.multi_reduction <add>, %47, %cst_17 [1] : vector<1x256xf32> to vector<1xf32>
    %49 = vector.shape_cast %48 : vector<1xf32> to vector<1x1xf32>
    %cst_18 = arith.constant 9.765625E-4 : f32
    %50 = vector.broadcast %cst_18 : f32 to vector<1x1xf32>
    %51 = arith.mulf %49, %50 : vector<1x1xf32>
    %cst_19 = arith.constant 0.000000e+00 : f32
    %52 = vector.broadcast %cst_19 : f32 to vector<1x256xf32>
    %53 = arith.select %20, %28, %52 : vector<1x256xi1>, vector<1x256xf32>
    %cst_20 = arith.constant dense<0.000000e+00> : vector<1xf32>
    %54 = vector.multi_reduction <add>, %53, %cst_20 [1] : vector<1x256xf32> to vector<1xf32>
    %55 = vector.shape_cast %54 : vector<1xf32> to vector<1x1xf32>
    %cst_21 = arith.constant 9.765625E-4 : f32
    %56 = vector.broadcast %cst_21 : f32 to vector<1x1xf32>
    %57 = arith.mulf %55, %56 : vector<1x1xf32>
    %58 = arith.mulf %51, %51 : vector<1x1xf32>
    %59 = arith.subf %57, %58 : vector<1x1xf32>
    %cst_22 = arith.constant 9.99999974E-6 : f32
    %60 = vector.broadcast %cst_22 : f32 to vector<1x1xf32>
    %61 = arith.addf %59, %60 : vector<1x1xf32>
    %62 = math.rsqrt %61 : vector<1x1xf32>
    %63 = vector.broadcast %45 : vector<1x1xf32> to vector<8x1xf32>
    %64 = arith.mulf %22, %63 : vector<8x1xf32>
    %65 = arith.mulf %34, %45 : vector<1x1xf32>
    %66 = vector.broadcast %65 : vector<1x1xf32> to vector<8x1xf32>
    %67 = arith.mulf %66, %22 : vector<8x1xf32>
    %68 = arith.subf %23, %67 : vector<8x1xf32>
    %69 = vector.broadcast %62 : vector<1x1xf32> to vector<8x1xf32>
    %70 = arith.mulf %22, %69 : vector<8x1xf32>
    %71 = arith.mulf %51, %62 : vector<1x1xf32>
    %72 = vector.broadcast %71 : vector<1x1xf32> to vector<8x1xf32>
    %73 = arith.mulf %72, %22 : vector<8x1xf32>
    %74 = arith.subf %23, %73 : vector<8x1xf32>
    %75 = vector.shape_cast %20 : vector<1x256xi1> to vector<1x256xi1>
    %76 = vector.broadcast %75 : vector<1x256xi1> to vector<8x256xi1>
    %77 = vector.shape_cast %70 : vector<8x1xf32> to vector<8x1xf32>
    %78 = vector.broadcast %77 : vector<8x1xf32> to vector<8x256xf32>
    %79 = vector.shape_cast %64 : vector<8x1xf32> to vector<8x1xf32>
    %80 = vector.broadcast %79 : vector<8x1xf32> to vector<8x256xf32>
    %81 = arith.select %76, %78, %80 : vector<8x256xi1>, vector<8x256xf32>
    %82 = vector.shape_cast %20 : vector<1x256xi1> to vector<1x256xi1>
    %83 = vector.broadcast %82 : vector<1x256xi1> to vector<8x256xi1>
    %84 = vector.shape_cast %74 : vector<8x1xf32> to vector<8x1xf32>
    %85 = vector.broadcast %84 : vector<8x1xf32> to vector<8x256xf32>
    %86 = vector.shape_cast %68 : vector<8x1xf32> to vector<8x1xf32>
    %87 = vector.broadcast %86 : vector<8x1xf32> to vector<8x256xf32>
    %88 = arith.select %83, %85, %87 : vector<8x256xi1>, vector<8x256xf32>
    %89 = arith.mulf %21, %81 : vector<8x256xf32>
    %90 = arith.addf %89, %88 : vector<8x256xf32>
    %cst_23 = arith.constant 0.000000e+00 : f32
    %91 = vector.broadcast %cst_23 : f32 to vector<8x256xf32>
    %92 = arith.subf %91, %90 : vector<8x256xf32>
    %93 = math.exp %92 : vector<8x256xf32>
    %cst_24 = arith.constant 1.000000e+00 : f32
    %94 = vector.broadcast %cst_24 : f32 to vector<8x256xf32>
    %95 = arith.addf %94, %93 : vector<8x256xf32>
    %96 = tpu.reciprocal %95 : vector<8x256xf32> -> vector<8x256xf32>
    %97 = arith.mulf %90, %96 : vector<8x256xf32>
    %c1_i32 = arith.constant 1 : i32
    %98 = tpu.dynamic_rotate %97 by %c1_i32 dim 1 : vector<8x256xf32>, i32 -> vector<8x256xf32>
    %cst_25 = arith.constant 0.000000e+00 : f32
    %99 = vector.shape_cast %7 : vector<1x256xi1> to vector<1x256xi1>
    %100 = vector.broadcast %99 : vector<1x256xi1> to vector<8x256xi1>
    %101 = vector.broadcast %cst_25 : f32 to vector<8x256xf32>
    %102 = arith.select %100, %101, %98 : vector<8x256xi1>, vector<8x256xf32>
    %c0_26 = arith.constant 0 : index
    %c0_27 = arith.constant 0 : index
    %103 = vector.load %arg10[%c0_26, %c0_27] : memref<32x256xf32, #tpu.memory_space<vmem>>, vector<8x256xf32>
    tpu.vector_store %arg10[%c0_26, %c0_27], %102 {strides = array<i32>} : memref<32x256xf32, #tpu.memory_space<vmem>>, vector<8x256xf32>,
    %c8 = arith.constant 8 : index
    %c0_28 = arith.constant 0 : index
    %104 = vector.load %arg10[%c8, %c0_28] : memref<32x256xf32, #tpu.memory_space<vmem>>, vector<8x256xf32>
    tpu.vector_store %arg10[%c8, %c0_28], %97 {strides = array<i32>} : memref<32x256xf32, #tpu.memory_space<vmem>>, vector<8x256xf32>,
    %c255_i32_29 = arith.constant 255 : i32
    %105 = tpu.dynamic_rotate %97 by %c255_i32_29 dim 1 : vector<8x256xf32>, i32 -> vector<8x256xf32>
    %cst_30 = arith.constant 0.000000e+00 : f32
    %106 = vector.shape_cast %10 : vector<1x256xi1> to vector<1x256xi1>
    %107 = vector.broadcast %106 : vector<1x256xi1> to vector<8x256xi1>
    %108 = vector.broadcast %cst_30 : f32 to vector<8x256xf32>
    %109 = arith.select %107, %108, %105 : vector<8x256xi1>, vector<8x256xf32>
    %c16 = arith.constant 16 : index
    %c0_31 = arith.constant 0 : index
    %110 = vector.load %arg10[%c16, %c0_31] : memref<32x256xf32, #tpu.memory_space<vmem>>, vector<8x256xf32>
    tpu.vector_store %arg10[%c16, %c0_31], %109 {strides = array<i32>} : memref<32x256xf32, #tpu.memory_space<vmem>>, vector<8x256xf32>,
    %c24 = arith.constant 24 : index
    %c0_32 = arith.constant 0 : index
    %111 = vector.load %arg10[%c24, %c0_32] : memref<32x256xf32, #tpu.memory_space<vmem>>, vector<8x256xf32>
    tpu.vector_store %arg10[%c24, %c0_32], %21 {strides = array<i32>} : memref<32x256xf32, #tpu.memory_space<vmem>>, vector<8x256xf32>,
    %c0_33 = arith.constant 0 : index
    %c0_34 = arith.constant 0 : index
    %112 = vector.load %arg5[%c0_33, %c0_34] : memref<32x32xf32, #tpu.memory_space<vmem>>, vector<32x32xf32>
    %c0_35 = arith.constant 0 : index
    %c0_36 = arith.constant 0 : index
    %113 = vector.load %arg10[%c0_35, %c0_36] : memref<32x256xf32, #tpu.memory_space<vmem>>, vector<32x256xf32>
    %cst_37 = arith.constant dense<0.000000e+00> : vector<32x256xf32>
    %114 = tpu.matmul %112, %113, %cst_37 {dimension_numbers = #tpu.dot_dimension_numbers<[1], [0], [0], [1], [0, 0, 1, 1], [], []>} : vector<32x32xf32>, vector<32x256xf32>, vector<32x256xf32> -> vector<32x256xf32>
    %c0_38 = arith.constant 0 : index
    %c0_39 = arith.constant 0 : index
    %115 = vector.load %arg6[%c0_38, %c0_39] : memref<32x1xf32, #tpu.memory_space<vmem>>, vector<32x1xf32>
    %116 = vector.broadcast %115 : vector<32x1xf32> to vector<32x256xf32>
    %117 = arith.addf %114, %116 : vector<32x256xf32>
    %118 = vector.extract_strided_slice %117 {offsets = [0, 0], sizes = [16, 256], strides = [1, 1]} : vector<32x256xf32> to vector<16x256xf32>
    %119 = vector.extract_strided_slice %117 {offsets = [16, 0], sizes = [16, 256], strides = [1, 1]} : vector<32x256xf32> to vector<16x256xf32>
    %cst_40 = arith.constant dense<0.000000e+00> : vector<256xf32>
    %120 = vector.multi_reduction <add>, %118, %cst_40 [0] : vector<16x256xf32> to vector<256xf32>
    %121 = vector.shape_cast %120 : vector<256xf32> to vector<1x256xf32>
    %122 = arith.mulf %118, %118 : vector<16x256xf32>
    %cst_41 = arith.constant dense<0.000000e+00> : vector<256xf32>
    %123 = vector.multi_reduction <add>, %122, %cst_41 [0] : vector<16x256xf32> to vector<256xf32>
    %124 = vector.shape_cast %123 : vector<256xf32> to vector<1x256xf32>
    %cst_42 = arith.constant 0.000000e+00 : f32
    %125 = vector.broadcast %cst_42 : f32 to vector<1x256xf32>
    %126 = arith.select %15, %121, %125 : vector<1x256xi1>, vector<1x256xf32>
    %cst_43 = arith.constant dense<0.000000e+00> : vector<1xf32>
    %127 = vector.multi_reduction <add>, %126, %cst_43 [1] : vector<1x256xf32> to vector<1xf32>
    %128 = vector.shape_cast %127 : vector<1xf32> to vector<1x1xf32>
    %cst_44 = arith.constant 4.8828125E-4 : f32
    %129 = vector.broadcast %cst_44 : f32 to vector<1x1xf32>
    %130 = arith.mulf %128, %129 : vector<1x1xf32>
    %cst_45 = arith.constant 0.000000e+00 : f32
    %131 = vector.broadcast %cst_45 : f32 to vector<1x256xf32>
    %132 = arith.select %15, %124, %131 : vector<1x256xi1>, vector<1x256xf32>
    %cst_46 = arith.constant dense<0.000000e+00> : vector<1xf32>
    %133 = vector.multi_reduction <add>, %132, %cst_46 [1] : vector<1x256xf32> to vector<1xf32>
    %134 = vector.shape_cast %133 : vector<1xf32> to vector<1x1xf32>
    %cst_47 = arith.constant 4.8828125E-4 : f32
    %135 = vector.broadcast %cst_47 : f32 to vector<1x1xf32>
    %136 = arith.mulf %134, %135 : vector<1x1xf32>
    %137 = arith.mulf %130, %130 : vector<1x1xf32>
    %138 = arith.subf %136, %137 : vector<1x1xf32>
    %cst_48 = arith.constant 9.99999974E-6 : f32
    %139 = vector.broadcast %cst_48 : f32 to vector<1x1xf32>
    %140 = arith.addf %138, %139 : vector<1x1xf32>
    %141 = math.rsqrt %140 : vector<1x1xf32>
    %cst_49 = arith.constant 0.000000e+00 : f32
    %142 = vector.broadcast %cst_49 : f32 to vector<1x256xf32>
    %143 = arith.select %20, %121, %142 : vector<1x256xi1>, vector<1x256xf32>
    %cst_50 = arith.constant dense<0.000000e+00> : vector<1xf32>
    %144 = vector.multi_reduction <add>, %143, %cst_50 [1] : vector<1x256xf32> to vector<1xf32>
    %145 = vector.shape_cast %144 : vector<1xf32> to vector<1x1xf32>
    %cst_51 = arith.constant 4.8828125E-4 : f32
    %146 = vector.broadcast %cst_51 : f32 to vector<1x1xf32>
    %147 = arith.mulf %145, %146 : vector<1x1xf32>
    %cst_52 = arith.constant 0.000000e+00 : f32
    %148 = vector.broadcast %cst_52 : f32 to vector<1x256xf32>
    %149 = arith.select %20, %124, %148 : vector<1x256xi1>, vector<1x256xf32>
    %cst_53 = arith.constant dense<0.000000e+00> : vector<1xf32>
    %150 = vector.multi_reduction <add>, %149, %cst_53 [1] : vector<1x256xf32> to vector<1xf32>
    %151 = vector.shape_cast %150 : vector<1xf32> to vector<1x1xf32>
    %cst_54 = arith.constant 4.8828125E-4 : f32
    %152 = vector.broadcast %cst_54 : f32 to vector<1x1xf32>
    %153 = arith.mulf %151, %152 : vector<1x1xf32>
    %154 = arith.mulf %147, %147 : vector<1x1xf32>
    %155 = arith.subf %153, %154 : vector<1x1xf32>
    %cst_55 = arith.constant 9.99999974E-6 : f32
    %156 = vector.broadcast %cst_55 : f32 to vector<1x1xf32>
    %157 = arith.addf %155, %156 : vector<1x1xf32>
    %158 = math.rsqrt %157 : vector<1x1xf32>
    %c0_56 = arith.constant 0 : index
    %c0_57 = arith.constant 0 : index
    %c0_58 = arith.constant 0 : index
    %159 = vector.load %arg2[%c0_56, %c0_57, %c0_58] : memref<2x32x1xf32, #tpu.memory_space<vmem>>, vector<1x16x1xf32>
    %160 = vector.shape_cast %159 : vector<1x16x1xf32> to vector<16x1xf32>
    %c1 = arith.constant 1 : index
    %c0_59 = arith.constant 0 : index
    %c0_60 = arith.constant 0 : index
    %161 = vector.load %arg2[%c1, %c0_59, %c0_60] : memref<2x32x1xf32, #tpu.memory_space<vmem>>, vector<1x16x1xf32>
    %162 = vector.shape_cast %161 : vector<1x16x1xf32> to vector<16x1xf32>
    %c0_61 = arith.constant 0 : index
    %c16_62 = arith.constant 16 : index
    %c0_63 = arith.constant 0 : index
    %163 = vector.load %arg2[%c0_61, %c16_62, %c0_63] : memref<2x32x1xf32, #tpu.memory_space<vmem>>, vector<1x16x1xf32>
    %164 = vector.shape_cast %163 : vector<1x16x1xf32> to vector<16x1xf32>
    %c1_64 = arith.constant 1 : index
    %c16_65 = arith.constant 16 : index
    %c0_66 = arith.constant 0 : index
    %165 = vector.load %arg2[%c1_64, %c16_65, %c0_66] : memref<2x32x1xf32, #tpu.memory_space<vmem>>, vector<1x16x1xf32>
    %166 = vector.shape_cast %165 : vector<1x16x1xf32> to vector<16x1xf32>
    %167 = vector.broadcast %141 : vector<1x1xf32> to vector<16x1xf32>
    %168 = arith.mulf %160, %167 : vector<16x1xf32>
    %169 = arith.mulf %130, %141 : vector<1x1xf32>
    %170 = vector.broadcast %169 : vector<1x1xf32> to vector<16x1xf32>
    %171 = arith.mulf %170, %160 : vector<16x1xf32>
    %172 = arith.subf %164, %171 : vector<16x1xf32>
    %173 = vector.broadcast %158 : vector<1x1xf32> to vector<16x1xf32>
    %174 = arith.mulf %162, %173 : vector<16x1xf32>
    %175 = arith.mulf %147, %158 : vector<1x1xf32>
    %176 = vector.broadcast %175 : vector<1x1xf32> to vector<16x1xf32>
    %177 = arith.mulf %176, %162 : vector<16x1xf32>
    %178 = arith.subf %166, %177 : vector<16x1xf32>
    %179 = vector.shape_cast %20 : vector<1x256xi1> to vector<1x256xi1>
    %180 = vector.broadcast %179 : vector<1x256xi1> to vector<16x256xi1>
    %181 = vector.shape_cast %174 : vector<16x1xf32> to vector<16x1xf32>
    %182 = vector.broadcast %181 : vector<16x1xf32> to vector<16x256xf32>
    %183 = vector.shape_cast %168 : vector<16x1xf32> to vector<16x1xf32>
    %184 = vector.broadcast %183 : vector<16x1xf32> to vector<16x256xf32>
    %185 = arith.select %180, %182, %184 : vector<16x256xi1>, vector<16x256xf32>
    %186 = vector.shape_cast %20 : vector<1x256xi1> to vector<1x256xi1>
    %187 = vector.broadcast %186 : vector<1x256xi1> to vector<16x256xi1>
    %188 = vector.shape_cast %178 : vector<16x1xf32> to vector<16x1xf32>
    %189 = vector.broadcast %188 : vector<16x1xf32> to vector<16x256xf32>
    %190 = vector.shape_cast %172 : vector<16x1xf32> to vector<16x1xf32>
    %191 = vector.broadcast %190 : vector<16x1xf32> to vector<16x256xf32>
    %192 = arith.select %187, %189, %191 : vector<16x256xi1>, vector<16x256xf32>
    %193 = arith.mulf %118, %185 : vector<16x256xf32>
    %194 = arith.addf %193, %192 : vector<16x256xf32>
    %cst_67 = arith.constant 0.000000e+00 : f32
    %195 = vector.broadcast %cst_67 : f32 to vector<16x256xf32>
    %196 = arith.subf %195, %194 : vector<16x256xf32>
    %197 = math.exp %196 : vector<16x256xf32>
    %cst_68 = arith.constant 1.000000e+00 : f32
    %198 = vector.broadcast %cst_68 : f32 to vector<16x256xf32>
    %199 = arith.addf %198, %197 : vector<16x256xf32>
    %200 = tpu.reciprocal %199 : vector<16x256xf32> -> vector<16x256xf32>
    %201 = arith.mulf %194, %200 : vector<16x256xf32>
    %c1_i32_69 = arith.constant 1 : i32
    %202 = tpu.dynamic_rotate %201 by %c1_i32_69 dim 1 : vector<16x256xf32>, i32 -> vector<16x256xf32>
    %cst_70 = arith.constant 0.000000e+00 : f32
    %203 = vector.shape_cast %7 : vector<1x256xi1> to vector<1x256xi1>
    %204 = vector.broadcast %203 : vector<1x256xi1> to vector<16x256xi1>
    %205 = vector.broadcast %cst_70 : f32 to vector<16x256xf32>
    %206 = arith.select %204, %205, %202 : vector<16x256xi1>, vector<16x256xf32>
    %c0_71 = arith.constant 0 : index
    %c0_72 = arith.constant 0 : index
    %207 = vector.load %arg11[%c0_71, %c0_72] : memref<48x256xf32, #tpu.memory_space<vmem>>, vector<16x256xf32>
    tpu.vector_store %arg11[%c0_71, %c0_72], %206 {strides = array<i32>} : memref<48x256xf32, #tpu.memory_space<vmem>>, vector<16x256xf32>,
    %c16_73 = arith.constant 16 : index
    %c0_74 = arith.constant 0 : index
    %208 = vector.load %arg11[%c16_73, %c0_74] : memref<48x256xf32, #tpu.memory_space<vmem>>, vector<16x256xf32>
    tpu.vector_store %arg11[%c16_73, %c0_74], %201 {strides = array<i32>} : memref<48x256xf32, #tpu.memory_space<vmem>>, vector<16x256xf32>,
    %c255_i32_75 = arith.constant 255 : i32
    %209 = tpu.dynamic_rotate %201 by %c255_i32_75 dim 1 : vector<16x256xf32>, i32 -> vector<16x256xf32>
    %cst_76 = arith.constant 0.000000e+00 : f32
    %210 = vector.shape_cast %10 : vector<1x256xi1> to vector<1x256xi1>
    %211 = vector.broadcast %210 : vector<1x256xi1> to vector<16x256xi1>
    %212 = vector.broadcast %cst_76 : f32 to vector<16x256xf32>
    %213 = arith.select %211, %212, %209 : vector<16x256xi1>, vector<16x256xf32>
    %c32 = arith.constant 32 : index
    %c0_77 = arith.constant 0 : index
    %214 = vector.load %arg11[%c32, %c0_77] : memref<48x256xf32, #tpu.memory_space<vmem>>, vector<16x256xf32>
    tpu.vector_store %arg11[%c32, %c0_77], %213 {strides = array<i32>} : memref<48x256xf32, #tpu.memory_space<vmem>>, vector<16x256xf32>,
    %c0_78 = arith.constant 0 : index
    %c0_79 = arith.constant 0 : index
    %215 = vector.load %arg7[%c0_78, %c0_79] : memref<16x48xf32, #tpu.memory_space<vmem>>, vector<16x48xf32>
    %c0_80 = arith.constant 0 : index
    %c0_81 = arith.constant 0 : index
    %216 = vector.load %arg11[%c0_80, %c0_81] : memref<48x256xf32, #tpu.memory_space<vmem>>, vector<48x256xf32>
    %cst_82 = arith.constant dense<0.000000e+00> : vector<16x256xf32>
    %217 = tpu.matmul %215, %216, %cst_82 {dimension_numbers = #tpu.dot_dimension_numbers<[1], [0], [0], [1], [0, 0, 1, 1], [], []>} : vector<16x48xf32>, vector<48x256xf32>, vector<16x256xf32> -> vector<16x256xf32>
    %c0_83 = arith.constant 0 : index
    %c0_84 = arith.constant 0 : index
    %218 = vector.load %arg8[%c0_83, %c0_84] : memref<16x1xf32, #tpu.memory_space<vmem>>, vector<16x1xf32>
    %219 = vector.broadcast %218 : vector<16x1xf32> to vector<16x256xf32>
    %220 = arith.addf %217, %219 : vector<16x256xf32>
    %221 = arith.addf %220, %119 : vector<16x256xf32>
    %c0_85 = arith.constant 0 : index
    %c0_86 = arith.constant 0 : index
    %222 = vector.load %arg9[%c0_85, %c0_86] : memref<16x256xf32, #tpu.memory_space<vmem>>, vector<16x256xf32>
    tpu.vector_store %arg9[%c0_85, %c0_86], %221 {strides = array<i32>} : memref<16x256xf32, #tpu.memory_space<vmem>>, vector<16x256xf32>,
    return
  }
  func.func @transform_0(%arg0: i32) -> (i32, i32) {
    %c0_i32 = arith.constant 0 : i32
    %c0_i32_0 = arith.constant 0 : i32
    return %c0_i32, %arg0 : i32, i32
  }
  func.func @transform_1(%arg0: i32) -> (i32, i32, i32) {
    %c0_i32 = arith.constant 0 : i32
    %c0_i32_0 = arith.constant 0 : i32
    %c0_i32_1 = arith.constant 0 : i32
    return %arg0, %c0_i32, %c0_i32_0 : i32, i32, i32
  }
  func.func @transform_2(%arg0: i32) -> (i32, i32) {
    %c0_i32 = arith.constant 0 : i32
    %c0_i32_0 = arith.constant 0 : i32
    %c0_i32_1 = arith.constant 0 : i32
    return %c0_i32, %c0_i32_0 : i32, i32
  }
  func.func @transform_3(%arg0: i32) -> (i32, i32) {
    %c0_i32 = arith.constant 0 : i32
    %c0_i32_0 = arith.constant 0 : i32
    %c0_i32_1 = arith.constant 0 : i32
    return %c0_i32, %c0_i32_0 : i32, i32
  }
  func.func @transform_4(%arg0: i32) -> (i32, i32) {
    %c0_i32 = arith.constant 0 : i32
    %c0_i32_0 = arith.constant 0 : i32
    %c0_i32_1 = arith.constant 0 : i32
    return %c0_i32, %c0_i32_0 : i32, i32
  }
  func.func @transform_5(%arg0: i32) -> (i32, i32) {
    %c0_i32 = arith.constant 0 : i32
    %c0_i32_0 = arith.constant 0 : i32
    %c0_i32_1 = arith.constant 0 : i32
    return %c0_i32, %c0_i32_0 : i32, i32
  }
  func.func @transform_6(%arg0: i32) -> (i32, i32) {
    %c0_i32 = arith.constant 0 : i32
    %c0_i32_0 = arith.constant 0 : i32
    %c0_i32_1 = arith.constant 0 : i32
    return %c0_i32, %c0_i32_0 : i32, i32
  }
  func.func @transform_7(%arg0: i32) -> (i32, i32) {
    %c0_i32 = arith.constant 0 : i32
    %c0_i32_0 = arith.constant 0 : i32
    %c0_i32_1 = arith.constant 0 : i32
    return %c0_i32, %c0_i32_0 : i32, i32
  }
  func.func @transform_8(%arg0: i32) -> (i32, i32) {
    %c0_i32 = arith.constant 0 : i32
    %c0_i32_0 = arith.constant 0 : i32
    return %c0_i32, %arg0 : i32, i32
  }
}

</mosaic_0001>

<llo_original>
// kernel: tpu_custom_call.1
$region0: #{tpu_custom_call.1}
  #allocation0 [shape = 'u32[]', space=smem, size = 0x4, offset = 0x4, fixed_abs, tag = 'smem constant byte address 0x4 - core index']
  #allocation1 [shape = 'u32[72,128]{1,0:T(1,128)}', space=vmem, size = 0x9000, scoped, tag = 'internal scratch']
  #allocation2 [shape = 'f32[32,256]{1,0:T(8,128)}', space=vmem, size = 0x8000, scoped, tag = 'scratch operand']
  #allocation3 [shape = 'f32[48,256]{1,0:T(8,128)}', space=vmem, size = 0xc000, scoped, tag = 'scratch operand']
  %s0 = inlined_call_operand.vmem [shape: f32[8,512], index: 0, kind: input, shape index: {}]
  %s1 = inlined_call_operand.vmem [shape: f32[4,32,1], index: 1, kind: input, shape index: {}]
  %s2 = inlined_call_operand.vmem [shape: f32[8,1], index: 2, kind: input, shape index: {}]
  %s3 = inlined_call_operand.vmem [shape: f32[8,1], index: 3, kind: input, shape index: {}]
  %s4 = inlined_call_operand.vmem [shape: f32[32,32], index: 4, kind: input, shape index: {}]
  %s5 = inlined_call_operand.vmem [shape: f32[32,1], index: 5, kind: input, shape index: {}]
  %s6 = inlined_call_operand.vmem [shape: f32[16,48], index: 6, kind: input, shape index: {}]
  %s7 = inlined_call_operand.vmem [shape: f32[16,1], index: 7, kind: input, shape index: {}]
  %s8 = inlined_call_operand.hbm [shape: f32[16,512], index: 8, kind: output, shape index: {}]
  %s9 = sld [smem:[#allocation0]]
  $region65: #{tpu_custom_call.1} parent=0
    _
  %s11 = ssub.s32 1, %s9
  %s12 = scalar_select 0, %s11, %s9
  $region1: #{tpu_custom_call.1} parent=0
    #allocation4 [shape = 'u8[32768]{0}', space=vmem, size = 0x8000, scoped, tag = 'output window, operand 0']
    #allocation5 [shape = 's32[2]{0}', space=sflag, size = 0x8, scoped, tag = 'scoped memory for tpu_custom_call.1']
    %13 = vsyncpa [#allocation5], 0
    %s14 = scalar_lea.sflag [#allocation5], 1
    %15 = vsyncpa %s14, 0
    loop: start=0, step=1, limit=4
    $region2: #{tpu_custom_call.1} parent=1 // loop_pre_header
      _
    $region3: #{tpu_custom_call.1} parent=1 // loop_header
      %s17 = sphi 0, %s21
      %p18 = scmp.ge.s32.totalorder %s17, 4
      %s27 = sphi 0, %s29
      %s30 = sphi 0, %s27
      %s31 = sphi 0, %s30
      %s47 = sphi 0, %s31
      %s53 = sphi 0, %s55
      %s56 = sphi 0, %s53
      %s57 = sphi 0, %s56
      %s73 = sphi 0, %s57
      %s77 = sphi 0, %s77
      %s79 = sphi 0, %s77
      %s80 = sphi 0, %s79
      %s94 = sphi 0, %s80
      %s98 = sphi 0, %s98
      %s100 = sphi 0, %s98
      %s101 = sphi 0, %s100
      %s115 = sphi 0, %s101
      %s119 = sphi 0, %s119
      %s121 = sphi 0, %s119
      %s122 = sphi 0, %s121
      %s136 = sphi 0, %s122
      %s140 = sphi 0, %s140
      %s142 = sphi 0, %s140
      %s143 = sphi 0, %s142
      %s157 = sphi 0, %s143
      %s161 = sphi 0, %s161
      %s163 = sphi 0, %s161
      %s164 = sphi 0, %s163
      %s178 = sphi 0, %s164
      %s182 = sphi 0, %s182
      %s184 = sphi 0, %s182
      %s185 = sphi 0, %s184
      %s199 = sphi 0, %s185
      %s205 = sphi 0, %s207
      %s208 = sphi 0, %s205
      %s209 = sphi 0, %s208
      %s225 = sphi 0, %s209
    $region4: #{tpu_custom_call.1} parent=1 // loop_header_branch
      %20 = sbr.rel (%p18) target = $region8
    $region5: #{tpu_custom_call.1} parent=1 // loop_body
      %s22 = ssub.s32 %s17, 1
      %s23 = ssub.s32 %s17, 2
      %s24 = sadd.s32 %s17, 1
      %s25 = ssub.s32 %s17, %s24
      %p26 = scmp.eq.s32.totalorder %s25, 0
      %s28 = sadd.s32 %s27, 1
      %s29 = scalar_select %p26, %s27, %s28
      %p32 = pneg %p26
      %p33 = scmp.eq.s32.totalorder %s17, 1
      %p34 = por %p32, %p33
      %p35 = scmp.ne.s32.totalorder %s27, %s30
      %p36 = scmp.eq.s32.totalorder %s17, 0
      %p37 = por %p35, %p36
      %p38 = scmp.ne.s32.totalorder %s27, %s30
      %p39 = scmp.eq.s32.totalorder %s22, 1
      %p40 = por %p38, %p39
      %p41 = scmp.ne.s32.totalorder %s30, %s31
      %p42 = scmp.eq.s32.totalorder %s22, 0
      %p43 = por %p41, %p42
      %p44 = scmp.ne.s32.totalorder %s30, %s31
      %p45 = scmp.eq.s32.totalorder %s23, 1
      %p46 = por %p44, %p45
      %p48 = scmp.ne.s32.totalorder %s31, %s47
      %p49 = scmp.eq.s32.totalorder %s23, 0
      %p50 = por %p48, %p49
      %s51 = ssub.s32 %s17, %s24
      %p52 = scmp.eq.s32.totalorder %s51, 0
      %s54 = sadd.s32 %s53, 1
      %s55 = scalar_select %p52, %s53, %s54
      %p58 = pneg %p52
      %p59 = scmp.eq.s32.totalorder %s17, 1
      %p60 = por %p58, %p59
      %p61 = scmp.ne.s32.totalorder %s53, %s56
      %p62 = scmp.eq.s32.totalorder %s17, 0
      %p63 = por %p61, %p62
      %p64 = scmp.ne.s32.totalorder %s53, %s56
      %p65 = scmp.eq.s32.totalorder %s22, 1
      %p66 = por %p64, %p65
      %p67 = scmp.ne.s32.totalorder %s56, %s57
      %p68 = scmp.eq.s32.totalorder %s22, 0
      %p69 = por %p67, %p68
      %p70 = scmp.ne.s32.totalorder %s56, %s57
      %p71 = scmp.eq.s32.totalorder %s23, 1
      %p72 = por %p70, %p71
      %p74 = scmp.ne.s32.totalorder %s57, %s73
      %p75 = scmp.eq.s32.totalorder %s23, 0
      %p76 = por %p74, %p75
      %s78 = sadd.s32 %s77, 1
      %p81 = scmp.eq.s32.totalorder %s17, 1
      %p82 = scmp.ne.s32.totalorder %s77, %s79
      %p83 = scmp.eq.s32.totalorder %s17, 0
      %p84 = por %p82, %p83
      %p85 = scmp.ne.s32.totalorder %s77, %s79
      %p86 = scmp.eq.s32.totalorder %s22, 1
      %p87 = por %p85, %p86
      %p88 = scmp.ne.s32.totalorder %s79, %s80
      %p89 = scmp.eq.s32.totalorder %s22, 0
      %p90 = por %p88, %p89
      %p91 = scmp.ne.s32.totalorder %s79, %s80
      %p92 = scmp.eq.s32.totalorder %s23, 1
      %p93 = por %p91, %p92
      %p95 = scmp.ne.s32.totalorder %s80, %s94
      %p96 = scmp.eq.s32.totalorder %s23, 0
      %p97 = por %p95, %p96
      %s99 = sadd.s32 %s98, 1
      %p102 = scmp.eq.s32.totalorder %s17, 1
      %p103 = scmp.ne.s32.totalorder %s98, %s100
      %p104 = scmp.eq.s32.totalorder %s17, 0
      %p105 = por %p103, %p104
      %p106 = scmp.ne.s32.totalorder %s98, %s100
      %p107 = scmp.eq.s32.totalorder %s22, 1
      %p108 = por %p106, %p107
      %p109 = scmp.ne.s32.totalorder %s100, %s101
      %p110 = scmp.eq.s32.totalorder %s22, 0
      %p111 = por %p109, %p110
      %p112 = scmp.ne.s32.totalorder %s100, %s101
      %p113 = scmp.eq.s32.totalorder %s23, 1
      %p114 = por %p112, %p113
      %p116 = scmp.ne.s32.totalorder %s101, %s115
      %p117 = scmp.eq.s32.totalorder %s23, 0
      %p118 = por %p116, %p117
      %s120 = sadd.s32 %s119, 1
      %p123 = scmp.eq.s32.totalorder %s17, 1
      %p124 = scmp.ne.s32.totalorder %s119, %s121
      %p125 = scmp.eq.s32.totalorder %s17, 0
      %p126 = por %p124, %p125
      %p127 = scmp.ne.s32.totalorder %s119, %s121
      %p128 = scmp.eq.s32.totalorder %s22, 1
      %p129 = por %p127, %p128
      %p130 = scmp.ne.s32.totalorder %s121, %s122
      %p131 = scmp.eq.s32.totalorder %s22, 0
      %p132 = por %p130, %p131
      %p133 = scmp.ne.s32.totalorder %s121, %s122
      %p134 = scmp.eq.s32.totalorder %s23, 1
      %p135 = por %p133, %p134
      %p137 = scmp.ne.s32.totalorder %s122, %s136
      %p138 = scmp.eq.s32.totalorder %s23, 0
      %p139 = por %p137, %p138
      %s141 = sadd.s32 %s140, 1
      %p144 = scmp.eq.s32.totalorder %s17, 1
      %p145 = scmp.ne.s32.totalorder %s140, %s142
      %p146 = scmp.eq.s32.totalorder %s17, 0
      %p147 = por %p145, %p146
      %p148 = scmp.ne.s32.totalorder %s140, %s142
      %p149 = scmp.eq.s32.totalorder %s22, 1
      %p150 = por %p148, %p149
      %p151 = scmp.ne.s32.totalorder %s142, %s143
      %p152 = scmp.eq.s32.totalorder %s22, 0
      %p153 = por %p151, %p152
      %p154 = scmp.ne.s32.totalorder %s142, %s143
      %p155 = scmp.eq.s32.totalorder %s23, 1
      %p156 = por %p154, %p155
      %p158 = scmp.ne.s32.totalorder %s143, %s157
      %p159 = scmp.eq.s32.totalorder %s23, 0
      %p160 = por %p158, %p159
      %s162 = sadd.s32 %s161, 1
      %p165 = scmp.eq.s32.totalorder %s17, 1
      %p166 = scmp.ne.s32.totalorder %s161, %s163
      %p167 = scmp.eq.s32.totalorder %s17, 0
      %p168 = por %p166, %p167
      %p169 = scmp.ne.s32.totalorder %s161, %s163
      %p170 = scmp.eq.s32.totalorder %s22, 1
      %p171 = por %p169, %p170
      %p172 = scmp.ne.s32.totalorder %s163, %s164
      %p173 = scmp.eq.s32.totalorder %s22, 0
      %p174 = por %p172, %p173
      %p175 = scmp.ne.s32.totalorder %s163, %s164
      %p176 = scmp.eq.s32.totalorder %s23, 1
      %p177 = por %p175, %p176
      %p179 = scmp.ne.s32.totalorder %s164, %s178
      %p180 = scmp.eq.s32.totalorder %s23, 0
      %p181 = por %p179, %p180
      %s183 = sadd.s32 %s182, 1
      %p186 = scmp.eq.s32.totalorder %s17, 1
      %p187 = scmp.ne.s32.totalorder %s182, %s184
      %p188 = scmp.eq.s32.totalorder %s17, 0
      %p189 = por %p187, %p188
      %p190 = scmp.ne.s32.totalorder %s182, %s184
      %p191 = scmp.eq.s32.totalorder %s22, 1
      %p192 = por %p190, %p191
      %p193 = scmp.ne.s32.totalorder %s184, %s185
      %p194 = scmp.eq.s32.totalorder %s22, 0
      %p195 = por %p193, %p194
      %p196 = scmp.ne.s32.totalorder %s184, %s185
      %p197 = scmp.eq.s32.totalorder %s23, 1
      %p198 = por %p196, %p197
      %p200 = scmp.ne.s32.totalorder %s185, %s199
      %p201 = scmp.eq.s32.totalorder %s23, 0
      %p202 = por %p200, %p201
      %s203 = ssub.s32 %s17, %s24
      %p204 = scmp.eq.s32.totalorder %s203, 0
      %s206 = sadd.s32 %s205, 1
      %s207 = scalar_select %p204, %s205, %s206
      %p210 = pneg %p204
      %p211 = scmp.eq.s32.totalorder %s17, 1
      %p212 = por %p210, %p211
      %p213 = scmp.ne.s32.totalorder %s205, %s208
      %p214 = scmp.eq.s32.totalorder %s17, 0
      %p215 = por %p213, %p214
      %p216 = scmp.ne.s32.totalorder %s205, %s208
      %p217 = scmp.eq.s32.totalorder %s22, 1
      %p218 = por %p216, %p217
      %p219 = scmp.ne.s32.totalorder %s208, %s209
      %p220 = scmp.eq.s32.totalorder %s22, 0
      %p221 = por %p219, %p220
      %p222 = scmp.ne.s32.totalorder %s208, %s209
      %p223 = scmp.eq.s32.totalorder %s23, 1
      %p224 = por %p222, %p223
      %p226 = scmp.ne.s32.totalorder %s209, %s225
      %p227 = scmp.eq.s32.totalorder %s23, 0
      %p228 = por %p226, %p227
      %p229 = scmp.le.s32.totalorder 1, %s17
      %p230 = scmp.lt.s32.totalorder %s17, 3
      %p231 = pnand %p229, %p230
      %p232 = pneg %p231
      // Predicated region
      $region9: #{tpu_custom_call.1} parent=5 // pred_check
        _
      $region10: #{tpu_custom_call.1} parent=5 // pred_check_branch
        %234 = sbr.rel (%p231) target = $region12
      $region11: #{tpu_custom_call.1} parent=5 // pred_region
        %s235 = ssub.s32 %s17, 1
        // Predicated region
        $region13: #{tpu_custom_call.1} parent=11 // pred_check
          %p236 = pneg %p90
        $region14: #{tpu_custom_call.1} parent=11 // pred_check_branch
          %238 = sbr.rel (%p236) target = $region16
        $region15: #{tpu_custom_call.1} parent=11 // pred_region
          _
        $region16: #{tpu_custom_call.1} parent=11 // pred_fallthru
          _
        // Predicated region
        $region17: #{tpu_custom_call.1} parent=11 // pred_check
          %p239 = pneg %p111
        $region18: #{tpu_custom_call.1} parent=11 // pred_check_branch
          %241 = sbr.rel (%p239) target = $region20
        $region19: #{tpu_custom_call.1} parent=11 // pred_region
          _
        $region20: #{tpu_custom_call.1} parent=11 // pred_fallthru
          _
        // Predicated region
        $region21: #{tpu_custom_call.1} parent=11 // pred_check
          %p242 = pneg %p132
        $region22: #{tpu_custom_call.1} parent=11 // pred_check_branch
          %244 = sbr.rel (%p242) target = $region24
        $region23: #{tpu_custom_call.1} parent=11 // pred_region
          _
        $region24: #{tpu_custom_call.1} parent=11 // pred_fallthru
          _
        // Predicated region
        $region25: #{tpu_custom_call.1} parent=11 // pred_check
          %p245 = pneg %p153
        $region26: #{tpu_custom_call.1} parent=11 // pred_check_branch
          %247 = sbr.rel (%p245) target = $region28
        $region27: #{tpu_custom_call.1} parent=11 // pred_region
          _
        $region28: #{tpu_custom_call.1} parent=11 // pred_fallthru
          _
        // Predicated region
        $region29: #{tpu_custom_call.1} parent=11 // pred_check
          %p248 = pneg %p174
        $region30: #{tpu_custom_call.1} parent=11 // pred_check_branch
          %250 = sbr.rel (%p248) target = $region32
        $region31: #{tpu_custom_call.1} parent=11 // pred_region
          _
        $region32: #{tpu_custom_call.1} parent=11 // pred_fallthru
          _
        // Predicated region
        $region33: #{tpu_custom_call.1} parent=11 // pred_check
          %p251 = pneg %p195
        $region34: #{tpu_custom_call.1} parent=11 // pred_check_branch
          %253 = sbr.rel (%p251) target = $region36
        $region35: #{tpu_custom_call.1} parent=11 // pred_region
          _
        $region36: #{tpu_custom_call.1} parent=11 // pred_fallthru
          _
      $region12: #{tpu_custom_call.1} parent=5 // pred_fallthru
        _
      %p254 = scmp.lt.s32.totalorder %s17, 2
      // Predicated region
      $region37: #{tpu_custom_call.1} parent=5 // pred_check
        %p255 = pneg %p254
      $region38: #{tpu_custom_call.1} parent=5 // pred_check_branch
        %257 = sbr.rel (%p255) target = $region40
      $region39: #{tpu_custom_call.1} parent=5 // pred_region
        // Predicated region
        $region41: #{tpu_custom_call.1} parent=39 // pred_check
          %p258 = pneg %p37
        $region42: #{tpu_custom_call.1} parent=39 // pred_check_branch
          %260 = sbr.rel (%p258) target = $region44
        $region43: #{tpu_custom_call.1} parent=39 // pred_region
          %s261 = smul.u32 2, %s17
          %p262 = scmp.lt.s32.totalorder %s261, 3
          %s263 = scalar_select %p262, %s261, 3
          %s264 = smul.addr %s263, 8
          %s265 = scalar_lea.vmem %s0, %s264
          %s266 = smul.u32 2, %s17
        $region44: #{tpu_custom_call.1} parent=39 // pred_fallthru
          _
        // Predicated region
        $region45: #{tpu_custom_call.1} parent=39 // pred_check
          %p267 = pneg %p63
        $region46: #{tpu_custom_call.1} parent=39 // pred_check_branch
          %269 = sbr.rel (%p267) target = $region48
        $region47: #{tpu_custom_call.1} parent=39 // pred_region
          %s270 = smul.u32 2, %s17
          %p271 = scmp.lt.s32.totalorder %s270, 3
          %s272 = scalar_select %p271, %s270, 3
          %s273 = smul.addr %s272, 4
          %s274 = smul.addr %s273, 8
          %s275 = scalar_lea.vmem %s1, %s274
          %s276 = smul.u32 2, %s17
        $region48: #{tpu_custom_call.1} parent=39 // pred_fallthru
          _
      $region40: #{tpu_custom_call.1} parent=5 // pred_fallthru
        _
      %p277 = scmp.le.s32.totalorder 1, %s17
      %p278 = scmp.lt.s32.totalorder %s17, 3
      %p279 = pnand %p277, %p278
      %p280 = pneg %p279
      // Predicated region
      $region49: #{tpu_custom_call.1} parent=5 // pred_check
        _
      $region50: #{tpu_custom_call.1} parent=5 // pred_check_branch
        %282 = sbr.rel (%p279) target = $region52
      $region51: #{tpu_custom_call.1} parent=5 // pred_region
        %s283 = ssub.s32 %s17, 1
        %s284 = smul.u32 2, %s22
        %p285 = scmp.lt.s32.totalorder %s284, 3
        %s286 = scalar_select %p285, %s284, 3
        %s287 = smul.addr %s286, 8
        %s288 = scalar_lea.vmem %s0, %s287
        %p289 = pneg %p43
        %p290 = pneg %p40
        %s291 = smul.u32 2, %s22
        %p292 = scmp.lt.s32.totalorder %s291, 3
        %s293 = scalar_select %p292, %s291, 3
        %s294 = smul.addr %s293, 4
        %s295 = smul.addr %s294, 8
        %s296 = scalar_lea.vmem %s1, %s295
        %p297 = pneg %p69
        %p298 = pneg %p66
        %p299 = pneg %p90
        %p300 = pneg %p87
        %p301 = pneg %p111
        %p302 = pneg %p108
        %p303 = pneg %p132
        %p304 = pneg %p129
        %p305 = pneg %p153
        %p306 = pneg %p150
        %p307 = pneg %p174
        %p308 = pneg %p171
        %p309 = pneg %p195
        %p310 = pneg %p192
        %p311 = pneg %p221
        %p312 = pneg %p218
        %s313 = sand.u32 %s208, 1
        %s314 = scalar_lea.sflag [#allocation5], %s313
        %s315 = sand.u32 %s208, 1
        %s316 = smul.addr %s315, 32
        %s317 = scalar_lea.vmem [#allocation4], %s316
        %s318 = smul.u32 2, %s22
        %p319 = scmp.lt.s32.totalorder %s318, 3
        %s320 = scalar_select %p319, %s318, 3
        %s321 = smul.addr %s320, 8
        %s322 = scalar_lea.vmem %s0, %s321
        %s323 = smul.u32 2, %s22
        %s324 = smul.u32 2, %s22
        %p325 = scmp.lt.s32.totalorder %s324, 3
        %s326 = scalar_select %p325, %s324, 3
        %s327 = smul.addr %s326, 4
        %s328 = smul.addr %s327, 8
        %s329 = scalar_lea.vmem %s1, %s328
        %s330 = smul.u32 2, %s22
        %s331 = smul.u32 2, %s22
        %v332 = vlaneseq
        %v333 = vand.u32 %v332, 127
        %v334 = vadd.s32 %v333, 128
        %vm335 = vcmp.eq.s32.totalorder %v333, 0
        %vm336 = vcmp.eq.s32.totalorder %v334, 0
        %vm337 = vcmp.eq.s32.totalorder %v333, 127
        %vm338 = vcmp.eq.s32.totalorder %v334, 127
        %vm339 = vcmp.eq.s32.totalorder %v333, 128
        %vm340 = vcmp.eq.s32.totalorder %v334, 128
        %vm341 = vmor %vm335, %vm339
        %vm342 = vmor %vm336, %vm340
        %vm343 = vcmp.eq.s32.totalorder %v333, 255
        %vm344 = vcmp.eq.s32.totalorder %v334, 255
        %vm345 = vmor %vm337, %vm343
        %vm346 = vmor %vm338, %vm344
        %vm347 = vcmp.ge.s32.totalorder %v333, 0
        %vm348 = vcmp.ge.s32.totalorder %v334, 0
        %vm349 = vcmp.lt.s32.totalorder %v333, 128
        %vm350 = vcmp.lt.s32.totalorder %v334, 128
        %vm351 = vmand %vm347, %vm349
        %vm352 = vmand %vm348, %vm350
        %vm353 = vcmp.ge.s32.totalorder %v333, 128
        %vm354 = vcmp.ge.s32.totalorder %v334, 128
        %vm355 = vcmp.lt.s32.totalorder %v333, 256
        %vm356 = vcmp.lt.s32.totalorder %v334, 256
        %vm357 = vmand %vm353, %vm355
        %vm358 = vmand %vm354, %vm356
        %v359 = vld [vmem:[%s322] sm:$0xff]
        %v360 = vld [vmem:[%s322 + $0x8] sm:$0xff]
        %v361 = vld [vmem:[%s2] sm:$0xff]
        %v362 = vld [vmem:[%s3] sm:$0xff]
        %v363 = vrot.slane %v359, 4
        %v364 = vadd.f32 %v359, %v363
        %v365 = vrot.slane %v364, 2
        %v366 = vadd.f32 %v364, %v365
        %v367 = vrot.slane %v366, 1
        %v368 = vadd.f32 %v366, %v367
        %v369 = vrot.slane %v360, 4
        %v370 = vadd.f32 %v360, %v369
        %v371 = vrot.slane %v370, 2
        %v372 = vadd.f32 %v370, %v371
        %v373 = vrot.slane %v372, 1
        %v374 = vadd.f32 %v372, %v373
        %v375 = vmul.f32 %v359, %v359
        %v376 = vmul.f32 %v360, %v360
        %v377 = vrot.slane %v375, 4
        %v378 = vadd.f32 %v375, %v377
        %v379 = vrot.slane %v378, 2
        %v380 = vadd.f32 %v378, %v379
        %v381 = vrot.slane %v380, 1
        %v382 = vadd.f32 %v380, %v381
        %v383 = vrot.slane %v376, 4
        %v384 = vadd.f32 %v376, %v383
        %v385 = vrot.slane %v384, 2
        %v386 = vadd.f32 %v384, %v385
        %v387 = vrot.slane %v386, 1
        %v388 = vadd.f32 %v386, %v387
        %v389 = vsel %vm351, %v368, 0.0
        %v390 = vsel %vm352, %v374, 0.0
        %v391 = vadd.f32 %v389, %v390
        %392 = vadd.xlane.f32.xlu0 %v391
        %v393 = vpop.xlane.xlu0 %392
        %v394 = vmul.f32 %v393, 0.0009765625
        %v395 = vsel %vm351, %v382, 0.0
        %v396 = vsel %vm352, %v388, 0.0
        %v397 = vadd.f32 %v395, %v396
        %398 = vadd.xlane.f32.xlu0 %v397
        %v399 = vpop.xlane.xlu0 %398
        %v400 = vmul.f32 %v399, 0.0009765625
        %v401 = vmul.f32 %v394, %v394
        %v402 = vsub.f32 %v400, %v401
        %v403 = vadd.f32 %v402, 1e-05
        %v404 = vrsqrt.pop %v403
        %v405 = vmul.f32 %v404, %v403
        %v406 = vmul.f32 %v405, %v404
        %v407 = vmul.f32 0.5, %v406
        %v408 = vsub.f32 1.5, %v407
        %v409 = vmul.f32 %v404, %v408
        %vm410 = vweird.f32 %v403
        %vm411 = vweird.f32 %v404
        %vm412 = vmor %vm410, %vm411
        %v413 = vsel %vm412, %v404, %v409
        %v414 = vsel %vm357, %v368, 0.0
        %v415 = vsel %vm358, %v374, 0.0
        %v416 = vadd.f32 %v414, %v415
        %417 = vadd.xlane.f32.xlu0 %v416
        %v418 = vpop.xlane.xlu0 %417
        %v419 = vmul.f32 %v418, 0.0009765625
        %v420 = vsel %vm357, %v382, 0.0
        %v421 = vsel %vm358, %v388, 0.0
        %v422 = vadd.f32 %v420, %v421
        %423 = vadd.xlane.f32.xlu0 %v422
        %v424 = vpop.xlane.xlu0 %423
        %v425 = vmul.f32 %v424, 0.0009765625
        %v426 = vmul.f32 %v419, %v419
        %v427 = vsub.f32 %v425, %v426
        %v428 = vadd.f32 %v427, 1e-05
        %v429 = vrsqrt.pop %v428
        %v430 = vmul.f32 %v429, %v428
        %v431 = vmul.f32 %v430, %v429
        %v432 = vmul.f32 0.5, %v431
        %v433 = vsub.f32 1.5, %v432
        %v434 = vmul.f32 %v429, %v433
        %vm435 = vweird.f32 %v428
        %vm436 = vweird.f32 %v429
        %vm437 = vmor %vm435, %vm436
        %v438 = vsel %vm437, %v429, %v434
        %v439 = vmul.f32 %v361, %v413
        %v440 = vmul.f32 %v394, %v413
        %v441 = vmul.f32 %v440, %v361
        %v442 = vsub.f32 %v362, %v441
        %v443 = vmul.f32 %v361, %v438
        %v444 = vmul.f32 %v419, %v438
        %v445 = vmul.f32 %v444, %v361
        %v446 = vsub.f32 %v362, %v445
        %v447 = vsel %vm357, 1, 0
        %v448 = vsel %vm358, 1, 0
        %vm449 = vcmp.eq.s32.totalorder %v447, 1
        %vm450 = vcmp.eq.s32.totalorder %v448, 1
        %452 = vset.pattern.permute.xlu0 0
        %453 = vperm.xlu0 %452, %v443
        %v454 = vpop.permute.xlu0 %453
        %457 = vset.pattern.permute.xlu0 0
        %458 = vperm.xlu0 %457, %v439
        %v459 = vpop.permute.xlu0 %458
        %v461 = vsel %vm449, %v454, %v459
        %v462 = vsel %vm450, %v454, %v459
        %464 = vset.pattern.permute.xlu0 0
        %465 = vperm.xlu0 %464, %v446
        %v466 = vpop.permute.xlu0 %465
        %469 = vset.pattern.permute.xlu0 0
        %470 = vperm.xlu0 %469, %v442
        %v471 = vpop.permute.xlu0 %470
        %v473 = vsel %vm449, %v466, %v471
        %v474 = vsel %vm450, %v466, %v471
        %v475 = vmul.f32 %v359, %v461
        %v476 = vmul.f32 %v360, %v462
        %v477 = vadd.f32 %v475, %v473
        %v478 = vadd.f32 %v476, %v474
        %v479 = vsub.f32 0.0, %v477
        %v480 = vsub.f32 0.0, %v478
        %v481 = vmul.f32 %v479, 1.442695
        %v482 = vpow.pop %v481
        %v483 = vmul.f32 %v480, 1.442695
        %v484 = vpow.pop %v483
        %v485 = vadd.f32 %v482, 1.0
        %v486 = vadd.f32 %v484, 1.0
        %v487 = vrcp.pop %v485
        %v488 = vmul.f32 %v485, %v487
        %v489 = vsub.f32 1.0, %v488
        %v490 = vmul.f32 %v487, %v489
        %v491 = vadd.f32 %v487, %v490
        %vm492 = vweird.f32 %v485
        %vm493 = vweird.f32 %v487
        %vm494 = vmor %vm492, %vm493
        %v495 = vsel %vm494, %v487, %v491
        %v496 = vand.u32 2147483647, %v485
        %vm497 = vcmp.eq.f32.partialorder %v496, 8.507059e+37
        %v498 = vand.u32 %v485, 2147483648
        %v499 = vor.u32 1.1754944e-38, %v498
        %v500 = vsel %vm497, %v499, %v495
        %v501 = vrcp.pop %v486
        %v502 = vmul.f32 %v486, %v501
        %v503 = vsub.f32 1.0, %v502
        %v504 = vmul.f32 %v501, %v503
        %v505 = vadd.f32 %v501, %v504
        %vm506 = vweird.f32 %v486
        %vm507 = vweird.f32 %v501
        %vm508 = vmor %vm506, %vm507
        %v509 = vsel %vm508, %v501, %v505
        %v510 = vand.u32 2147483647, %v486
        %vm511 = vcmp.eq.f32.partialorder %v510, 8.507059e+37
        %v512 = vand.u32 %v486, 2147483648
        %v513 = vor.u32 1.1754944e-38, %v512
        %v514 = vsel %vm511, %v513, %v509
        %v515 = vmul.f32 %v477, %v500
        %v516 = vmul.f32 %v478, %v514
        %517 = vrot.lane.b32.xlu0 %v515, 1
        %v518 = vpop.permute.xlu0 %517
        %519 = vrot.lane.b32.xlu0 %v516, 1
        %v520 = vpop.permute.xlu0 %519
        %vm521 = vcmp.lt.s32.totalorder %v333, 1
        %v522 = vsel %vm521, %v518, %v520
        %v523 = vsel %vm521, %v520, %v518
        %v524 = vsel %vm341, 1, 0
        %v525 = vsel %vm342, 1, 0
        %vm526 = vcmp.eq.s32.totalorder %v524, 1
        %vm527 = vcmp.eq.s32.totalorder %v525, 1
        %v528 = vsel %vm526, 0.0, %v523
        %v529 = vsel %vm527, 0.0, %v522
        %530 = vst [vmem:[#allocation2] sm:$0xff] %v528
        %531 = vst [vmem:[#allocation2 + $0x8] sm:$0xff] %v529
        %532 = vst [vmem:[#allocation2 + $0x10] sm:$0xff] %v515
        %533 = vst [vmem:[#allocation2 + $0x18] sm:$0xff] %v516
        %534 = vrot.lane.b32.xlu0 %v515, 127
        %v535 = vpop.permute.xlu0 %534
        %536 = vrot.lane.b32.xlu0 %v516, 127
        %v537 = vpop.permute.xlu0 %536
        %vm538 = vcmp.lt.s32.totalorder %v333, 127
        %v539 = vsel %vm538, %v535, %v537
        %v540 = vsel %vm538, %v537, %v535
        %v541 = vsel %vm345, 1, 0
        %v542 = vsel %vm346, 1, 0
        %vm543 = vcmp.eq.s32.totalorder %v541, 1
        %vm544 = vcmp.eq.s32.totalorder %v542, 1
        %v545 = vsel %vm543, 0.0, %v539
        %v546 = vsel %vm544, 0.0, %v540
        %547 = vst [vmem:[#allocation2 + $0x20] sm:$0xff] %v545
        %548 = vst [vmem:[#allocation2 + $0x28] sm:$0xff] %v546
        %549 = vst [vmem:[#allocation2 + $0x30] sm:$0xff] %v359
        %550 = vst [vmem:[#allocation2 + $0x38] sm:$0xff] %v360
        %v551 = vld [vmem:[%s4] sm:$0xff]
        %v552 = vld [vmem:[%s4 + $0x8] sm:$0xff]
        %v553 = vld [vmem:[%s4 + $0x10] sm:$0xff]
        %v554 = vld [vmem:[%s4 + $0x18] sm:$0xff]
        %v555 = vld [vmem:[#allocation2] sm:$0xff]
        %v556 = vld [vmem:[#allocation2 + $0x8] sm:$0xff]
        %v557 = vld [vmem:[#allocation2 + $0x10] sm:$0xff]
        %v558 = vld [vmem:[#allocation2 + $0x18] sm:$0xff]
        %v559 = vld [vmem:[#allocation2 + $0x20] sm:$0xff]
        %v560 = vld [vmem:[#allocation2 + $0x28] sm:$0xff]
        %v561 = vld [vmem:[#allocation2 + $0x30] sm:$0xff]
        %v562 = vld [vmem:[#allocation2 + $0x38] sm:$0xff]
        %v563 = vld [vmem:[%s5] sm:$0xff]
        %v564 = vld [vmem:[%s5 + $0x8] sm:$0xff]
        %v565 = vld [vmem:[%s5 + $0x10] sm:$0xff]
        %v566 = vld [vmem:[%s5 + $0x18] sm:$0xff]
        %568 = vset.pattern.permute.xlu0 0
        %569 = vperm.xlu0 %568, %v563
        %v570 = vpop.permute.xlu0 %569
        %573 = vset.pattern.permute.xlu0 0
        %574 = vperm.xlu0 %573, %v564
        %v575 = vpop.permute.xlu0 %574
        %578 = vset.pattern.permute.xlu0 0
        %579 = vperm.xlu0 %578, %v565
        %v580 = vpop.permute.xlu0 %579
        %583 = vset.pattern.permute.xlu0 0
        %584 = vperm.xlu0 %583, %v566
        %v585 = vpop.permute.xlu0 %584
        %vm587 = vcmask 261120
        %v589 = vsel %vm587, %v551, 0
        %v592 = vsel %vm587, %v552, 0
        %v595 = vsel %vm587, %v553, 0
        %v598 = vsel %vm587, %v554, 0
        %600 = vmatpush.msra.mxu0 0.0
        %601 = vmatpush.msra.mxu0 0.0
        %602 = vmatpush.msra.mxu0 0.0
        %603 = vmatpush.msra.mxu0 0.0
        %604 = vmatpush.msra.mxu0 0.0
        %605 = vmatpush.msra.mxu0 0.0
        %606 = vmatpush.msra.mxu0 0.0
        %607 = vmatpush.msra.mxu0 0.0
        %608 = vmatpush.msra.mxu0 0.0
        %609 = vmatpush.msra.mxu0 0.0
        %610 = vmatpush.msra.mxu0 0.0
        %611 = vmatpush.msra.mxu0 0.0
        %612 = vmatpush.msra.mxu0 %v561
        %613 = vmatpush.msra.mxu0 %v559
        %614 = vmatpush.msra.mxu0 %v557
        %615 = vmatpush.msra.mxu0 %v555
        %616 = vmatmul.f32.gmra.mxu0 %v589
        %v617 = vpop.f32.mrf.mxu0
        %v618 = vadd.f32 %v570, %v617
        %619 = vmatmul.f32.gmra.mxu0 %v592
        %v620 = vpop.f32.mrf.mxu0
        %v621 = vadd.f32 %v575, %v620
        %622 = vmatmul.f32.gmra.mxu0 %v595
        %v623 = vpop.f32.mrf.mxu0
        %v624 = vadd.f32 %v580, %v623
        %625 = vmatmul.f32.gmra.mxu0 %v598
        %v626 = vpop.f32.mrf.mxu0
        %v627 = vadd.f32 %v585, %v626
        %628 = vdwg.mxu0
        %629 = vmatpush.msra.mxu0 0.0
        %630 = vmatpush.msra.mxu0 0.0
        %631 = vmatpush.msra.mxu0 0.0
        %632 = vmatpush.msra.mxu0 0.0
        %633 = vmatpush.msra.mxu0 0.0
        %634 = vmatpush.msra.mxu0 0.0
        %635 = vmatpush.msra.mxu0 0.0
        %636 = vmatpush.msra.mxu0 0.0
        %637 = vmatpush.msra.mxu0 0.0
        %638 = vmatpush.msra.mxu0 0.0
        %639 = vmatpush.msra.mxu0 0.0
        %640 = vmatpush.msra.mxu0 0.0
        %641 = vmatpush.msra.mxu0 %v562
        %642 = vmatpush.msra.mxu0 %v560
        %643 = vmatpush.msra.mxu0 %v558
        %644 = vmatpush.msra.mxu0 %v556
        %645 = vmatmul.f32.gmra.mxu0 %v589
        %v646 = vpop.f32.mrf.mxu0
        %v647 = vadd.f32 %v570, %v646
        %648 = vmatmul.f32.gmra.mxu0 %v592
        %v649 = vpop.f32.mrf.mxu0
        %v650 = vadd.f32 %v575, %v649
        %651 = vmatmul.f32.gmra.mxu0 %v595
        %v652 = vpop.f32.mrf.mxu0
        %v653 = vadd.f32 %v580, %v652
        %654 = vmatmul.f32.gmra.mxu0 %v598
        %v655 = vpop.f32.mrf.mxu0
        %v656 = vadd.f32 %v585, %v655
        %657 = vdwg.mxu0
        %v658 = vadd.f32 %v618, %v621
        %v659 = vrot.slane %v658, 4
        %v660 = vadd.f32 %v658, %v659
        %v661 = vrot.slane %v660, 2
        %v662 = vadd.f32 %v660, %v661
        %v663 = vrot.slane %v662, 1
        %v664 = vadd.f32 %v662, %v663
        %v665 = vadd.f32 %v647, %v650
        %v666 = vrot.slane %v665, 4
        %v667 = vadd.f32 %v665, %v666
        %v668 = vrot.slane %v667, 2
        %v669 = vadd.f32 %v667, %v668
        %v670 = vrot.slane %v669, 1
        %v671 = vadd.f32 %v669, %v670
        %v672 = vmul.f32 %v618, %v618
        %v673 = vmul.f32 %v647, %v647
        %v674 = vmul.f32 %v621, %v621
        %v675 = vmul.f32 %v650, %v650
        %v676 = vadd.f32 %v672, %v674
        %v677 = vrot.slane %v676, 4
        %v678 = vadd.f32 %v676, %v677
        %v679 = vrot.slane %v678, 2
        %v680 = vadd.f32 %v678, %v679
        %v681 = vrot.slane %v680, 1
        %v682 = vadd.f32 %v680, %v681
        %v683 = vadd.f32 %v673, %v675
        %v684 = vrot.slane %v683, 4
        %v685 = vadd.f32 %v683, %v684
        %v686 = vrot.slane %v685, 2
        %v687 = vadd.f32 %v685, %v686
        %v688 = vrot.slane %v687, 1
        %v689 = vadd.f32 %v687, %v688
        %v690 = vsel %vm351, %v664, 0.0
        %v691 = vsel %vm352, %v671, 0.0
        %v692 = vadd.f32 %v690, %v691
        %693 = vadd.xlane.f32.xlu0 %v692
        %v694 = vpop.xlane.xlu0 %693
        %v695 = vmul.f32 %v694, 0.00048828125
        %v696 = vsel %vm351, %v682, 0.0
        %v697 = vsel %vm352, %v689, 0.0
        %v698 = vadd.f32 %v696, %v697
        %699 = vadd.xlane.f32.xlu0 %v698
        %v700 = vpop.xlane.xlu0 %699
        %v701 = vmul.f32 %v700, 0.00048828125
        %v702 = vmul.f32 %v695, %v695
        %v703 = vsub.f32 %v701, %v702
        %v704 = vadd.f32 %v703, 1e-05
        %v705 = vrsqrt.pop %v704
        %v706 = vmul.f32 %v705, %v704
        %v707 = vmul.f32 %v706, %v705
        %v708 = vmul.f32 0.5, %v707
        %v709 = vsub.f32 1.5, %v708
        %v710 = vmul.f32 %v705, %v709
        %vm711 = vweird.f32 %v704
        %vm712 = vweird.f32 %v705
        %vm713 = vmor %vm711, %vm712
        %v714 = vsel %vm713, %v705, %v710
        %v715 = vsel %vm357, %v664, 0.0
        %v716 = vsel %vm358, %v671, 0.0
        %v717 = vadd.f32 %v715, %v716
        %718 = vadd.xlane.f32.xlu0 %v717
        %v719 = vpop.xlane.xlu0 %718
        %v720 = vmul.f32 %v719, 0.00048828125
        %v721 = vsel %vm357, %v682, 0.0
        %v722 = vsel %vm358, %v689, 0.0
        %v723 = vadd.f32 %v721, %v722
        %724 = vadd.xlane.f32.xlu0 %v723
        %v725 = vpop.xlane.xlu0 %724
        %v726 = vmul.f32 %v725, 0.00048828125
        %v727 = vmul.f32 %v720, %v720
        %v728 = vsub.f32 %v726, %v727
        %v729 = vadd.f32 %v728, 1e-05
        %v730 = vrsqrt.pop %v729
        %v731 = vmul.f32 %v730, %v729
        %v732 = vmul.f32 %v731, %v730
        %v733 = vmul.f32 0.5, %v732
        %v734 = vsub.f32 1.5, %v733
        %v735 = vmul.f32 %v730, %v734
        %vm736 = vweird.f32 %v729
        %vm737 = vweird.f32 %v730
        %vm738 = vmor %vm736, %vm737
        %v739 = vsel %vm738, %v730, %v735
        %v740 = vld [vmem:[%s329] sm:$0xff]
        %v741 = vld [vmem:[%s329 + $0x8] sm:$0xff]
        %s742 = scalar_lea.vmem %s329, 32
        %v743 = vld [vmem:[%s742] sm:$0xff]
        %v744 = vld [vmem:[%s742 + $0x8] sm:$0xff]
        %v745 = vld [vmem:[%s329 + $0x10] sm:$0xff]
        %v746 = vld [vmem:[%s329 + $0x18] sm:$0xff]
        %v747 = vld [vmem:[%s742 + $0x10] sm:$0xff]
        %v748 = vld [vmem:[%s742 + $0x18] sm:$0xff]
        %v749 = vmul.f32 %v740, %v714
        %v750 = vmul.f32 %v741, %v714
        %v751 = vmul.f32 %v695, %v714
        %v752 = vmul.f32 %v751, %v740
        %v753 = vmul.f32 %v751, %v741
        %v754 = vsub.f32 %v745, %v752
        %v755 = vsub.f32 %v746, %v753
        %v756 = vmul.f32 %v743, %v739
        %v757 = vmul.f32 %v744, %v739
        %v758 = vmul.f32 %v720, %v739
        %v759 = vmul.f32 %v758, %v743
        %v760 = vmul.f32 %v758, %v744
        %v761 = vsub.f32 %v747, %v759
        %v762 = vsub.f32 %v748, %v760
        %764 = vset.pattern.permute.xlu0 0
        %765 = vperm.xlu0 %764, %v756
        %v766 = vpop.permute.xlu0 %765
        %769 = vset.pattern.permute.xlu0 0
        %770 = vperm.xlu0 %769, %v757
        %v771 = vpop.permute.xlu0 %770
        %774 = vset.pattern.permute.xlu0 0
        %775 = vperm.xlu0 %774, %v749
        %v776 = vpop.permute.xlu0 %775
        %779 = vset.pattern.permute.xlu0 0
        %780 = vperm.xlu0 %779, %v750
        %v781 = vpop.permute.xlu0 %780
        %v783 = vsel %vm449, %v766, %v776
        %v784 = vsel %vm450, %v766, %v776
        %v785 = vsel %vm449, %v771, %v781
        %v786 = vsel %vm450, %v771, %v781
        %788 = vset.pattern.permute.xlu0 0
        %789 = vperm.xlu0 %788, %v761
        %v790 = vpop.permute.xlu0 %789
        %793 = vset.pattern.permute.xlu0 0
        %794 = vperm.xlu0 %793, %v762
        %v795 = vpop.permute.xlu0 %794
        %798 = vset.pattern.permute.xlu0 0
        %799 = vperm.xlu0 %798, %v754
        %v800 = vpop.permute.xlu0 %799
        %803 = vset.pattern.permute.xlu0 0
        %804 = vperm.xlu0 %803, %v755
        %v805 = vpop.permute.xlu0 %804
        %v807 = vsel %vm449, %v790, %v800
        %v808 = vsel %vm450, %v790, %v800
        %v809 = vsel %vm449, %v795, %v805
        %v810 = vsel %vm450, %v795, %v805
        %v811 = vmul.f32 %v618, %v783
        %v812 = vmul.f32 %v647, %v784
        %v813 = vmul.f32 %v621, %v785
        %v814 = vmul.f32 %v650, %v786
        %v815 = vadd.f32 %v811, %v807
        %v816 = vadd.f32 %v812, %v808
        %v817 = vadd.f32 %v813, %v809
        %v818 = vadd.f32 %v814, %v810
        %v819 = vsub.f32 0.0, %v815
        %v820 = vsub.f32 0.0, %v816
        %v821 = vsub.f32 0.0, %v817
        %v822 = vsub.f32 0.0, %v818
        %v823 = vmul.f32 %v819, 1.442695
        %v824 = vpow.pop %v823
        %v825 = vmul.f32 %v820, 1.442695
        %v826 = vpow.pop %v825
        %v827 = vmul.f32 %v821, 1.442695
        %v828 = vpow.pop %v827
        %v829 = vmul.f32 %v822, 1.442695
        %v830 = vpow.pop %v829
        %v831 = vadd.f32 %v824, 1.0
        %v832 = vadd.f32 %v826, 1.0
        %v833 = vadd.f32 %v828, 1.0
        %v834 = vadd.f32 %v830, 1.0
        %v835 = vrcp.pop %v831
        %v836 = vmul.f32 %v831, %v835
        %v837 = vsub.f32 1.0, %v836
        %v838 = vmul.f32 %v835, %v837
        %v839 = vadd.f32 %v835, %v838
        %vm840 = vweird.f32 %v831
        %vm841 = vweird.f32 %v835
        %vm842 = vmor %vm840, %vm841
        %v843 = vsel %vm842, %v835, %v839
        %v844 = vand.u32 2147483647, %v831
        %vm845 = vcmp.eq.f32.partialorder %v844, 8.507059e+37
        %v846 = vand.u32 %v831, 2147483648
        %v847 = vor.u32 1.1754944e-38, %v846
        %v848 = vsel %vm845, %v847, %v843
        %v849 = vrcp.pop %v832
        %v850 = vmul.f32 %v832, %v849
        %v851 = vsub.f32 1.0, %v850
        %v852 = vmul.f32 %v849, %v851
        %v853 = vadd.f32 %v849, %v852
        %vm854 = vweird.f32 %v832
        %vm855 = vweird.f32 %v849
        %vm856 = vmor %vm854, %vm855
        %v857 = vsel %vm856, %v849, %v853
        %v858 = vand.u32 2147483647, %v832
        %vm859 = vcmp.eq.f32.partialorder %v858, 8.507059e+37
        %v860 = vand.u32 %v832, 2147483648
        %v861 = vor.u32 1.1754944e-38, %v860
        %v862 = vsel %vm859, %v861, %v857
        %v863 = vrcp.pop %v833
        %v864 = vmul.f32 %v833, %v863
        %v865 = vsub.f32 1.0, %v864
        %v866 = vmul.f32 %v863, %v865
        %v867 = vadd.f32 %v863, %v866
        %vm868 = vweird.f32 %v833
        %vm869 = vweird.f32 %v863
        %vm870 = vmor %vm868, %vm869
        %v871 = vsel %vm870, %v863, %v867
        %v872 = vand.u32 2147483647, %v833
        %vm873 = vcmp.eq.f32.partialorder %v872, 8.507059e+37
        %v874 = vand.u32 %v833, 2147483648
        %v875 = vor.u32 1.1754944e-38, %v874
        %v876 = vsel %vm873, %v875, %v871
        %v877 = vrcp.pop %v834
        %v878 = vmul.f32 %v834, %v877
        %v879 = vsub.f32 1.0, %v878
        %v880 = vmul.f32 %v877, %v879
        %v881 = vadd.f32 %v877, %v880
        %vm882 = vweird.f32 %v834
        %vm883 = vweird.f32 %v877
        %vm884 = vmor %vm882, %vm883
        %v885 = vsel %vm884, %v877, %v881
        %v886 = vand.u32 2147483647, %v834
        %vm887 = vcmp.eq.f32.partialorder %v886, 8.507059e+37
        %v888 = vand.u32 %v834, 2147483648
        %v889 = vor.u32 1.1754944e-38, %v888
        %v890 = vsel %vm887, %v889, %v885
        %v891 = vmul.f32 %v815, %v848
        %v892 = vmul.f32 %v816, %v862
        %v893 = vmul.f32 %v817, %v876
        %v894 = vmul.f32 %v818, %v890
        %895 = vrot.lane.b32.xlu0 %v891, 1
        %v896 = vpop.permute.xlu0 %895
        %897 = vrot.lane.b32.xlu0 %v893, 1
        %v898 = vpop.permute.xlu0 %897
        %899 = vrot.lane.b32.xlu0 %v892, 1
        %v900 = vpop.permute.xlu0 %899
        %901 = vrot.lane.b32.xlu0 %v894, 1
        %v902 = vpop.permute.xlu0 %901
        %v903 = vsel %vm521, %v896, %v900
        %v904 = vsel %vm521, %v898, %v902
        %v905 = vsel %vm521, %v900, %v896
        %v906 = vsel %vm521, %v902, %v898
        %v907 = vsel %vm526, 0.0, %v905
        %v908 = vsel %vm527, 0.0, %v903
        %v909 = vsel %vm526, 0.0, %v906
        %v910 = vsel %vm527, 0.0, %v904
        %911 = vst [vmem:[#allocation3] sm:$0xff] %v907
        %912 = vst [vmem:[#allocation3 + $0x8] sm:$0xff] %v908
        %913 = vst [vmem:[#allocation3 + $0x10] sm:$0xff] %v909
        %914 = vst [vmem:[#allocation3 + $0x18] sm:$0xff] %v910
        %915 = vst [vmem:[#allocation3 + $0x20] sm:$0xff] %v891
        %916 = vst [vmem:[#allocation3 + $0x28] sm:$0xff] %v892
        %917 = vst [vmem:[#allocation3 + $0x30] sm:$0xff] %v893
        %918 = vst [vmem:[#allocation3 + $0x38] sm:$0xff] %v894
        %919 = vrot.lane.b32.xlu0 %v891, 127
        %v920 = vpop.permute.xlu0 %919
        %921 = vrot.lane.b32.xlu0 %v893, 127
        %v922 = vpop.permute.xlu0 %921
        %923 = vrot.lane.b32.xlu0 %v892, 127
        %v924 = vpop.permute.xlu0 %923
        %925 = vrot.lane.b32.xlu0 %v894, 127
        %v926 = vpop.permute.xlu0 %925
        %v927 = vsel %vm538, %v920, %v924
        %v928 = vsel %vm538, %v922, %v926
        %v929 = vsel %vm538, %v924, %v920
        %v930 = vsel %vm538, %v926, %v922
        %v931 = vsel %vm543, 0.0, %v927
        %v932 = vsel %vm544, 0.0, %v929
        %v933 = vsel %vm543, 0.0, %v928
        %v934 = vsel %vm544, 0.0, %v930
        %935 = vst [vmem:[#allocation3 + $0x40] sm:$0xff] %v931
        %936 = vst [vmem:[#allocation3 + $0x48] sm:$0xff] %v932
        %937 = vst [vmem:[#allocation3 + $0x50] sm:$0xff] %v933
        %938 = vst [vmem:[#allocation3 + $0x58] sm:$0xff] %v934
        %v939 = vld [vmem:[%s6] sm:$0xff]
        %v940 = vld [vmem:[%s6 + $0x8] sm:$0xff]
        %v941 = vld [vmem:[#allocation3] sm:$0xff]
        %v942 = vld [vmem:[#allocation3 + $0x8] sm:$0xff]
        %v943 = vld [vmem:[#allocation3 + $0x10] sm:$0xff]
        %v944 = vld [vmem:[#allocation3 + $0x18] sm:$0xff]
        %v945 = vld [vmem:[#allocation3 + $0x20] sm:$0xff]
        %v946 = vld [vmem:[#allocation3 + $0x28] sm:$0xff]
        %v947 = vld [vmem:[#allocation3 + $0x30] sm:$0xff]
        %v948 = vld [vmem:[#allocation3 + $0x38] sm:$0xff]
        %v949 = vld [vmem:[#allocation3 + $0x40] sm:$0xff]
        %v950 = vld [vmem:[#allocation3 + $0x48] sm:$0xff]
        %v951 = vld [vmem:[#allocation3 + $0x50] sm:$0xff]
        %v952 = vld [vmem:[#allocation3 + $0x58] sm:$0xff]
        %v953 = vld [vmem:[%s7] sm:$0xff]
        %v954 = vld [vmem:[%s7 + $0x8] sm:$0xff]
        %956 = vset.pattern.permute.xlu0 0
        %957 = vperm.xlu0 %956, %v953
        %v958 = vpop.permute.xlu0 %957
        %961 = vset.pattern.permute.xlu0 0
        %962 = vperm.xlu0 %961, %v954
        %v963 = vpop.permute.xlu0 %962
        %vm965 = vcmask 392192
        %v967 = vsel %vm965, %v939, 0
        %v970 = vsel %vm965, %v940, 0
        %972 = vmatpush.msra.mxu0 0.0
        %973 = vmatpush.msra.mxu0 0.0
        %974 = vmatpush.msra.mxu0 0.0
        %975 = vmatpush.msra.mxu0 0.0
        %976 = vmatpush.msra.mxu0 0.0
        %977 = vmatpush.msra.mxu0 0.0
        %978 = vmatpush.msra.mxu0 0.0
        %979 = vmatpush.msra.mxu0 0.0
        %980 = vmatpush.msra.mxu0 0.0
        %981 = vmatpush.msra.mxu0 0.0
        %982 = vmatpush.msra.mxu0 %v951
        %983 = vmatpush.msra.mxu0 %v949
        %984 = vmatpush.msra.mxu0 %v947
        %985 = vmatpush.msra.mxu0 %v945
        %986 = vmatpush.msra.mxu0 %v943
        %987 = vmatpush.msra.mxu0 %v941
        %988 = vmatmul.f32.gmra.mxu0 %v967
        %v989 = vpop.f32.mrf.mxu0
        %v990 = vadd.f32 %v958, %v989
        %991 = vmatmul.f32.gmra.mxu0 %v970
        %v992 = vpop.f32.mrf.mxu0
        %v993 = vadd.f32 %v963, %v992
        %994 = vdwg.mxu0
        %995 = vmatpush.msra.mxu0 0.0
        %996 = vmatpush.msra.mxu0 0.0
        %997 = vmatpush.msra.mxu0 0.0
        %998 = vmatpush.msra.mxu0 0.0
        %999 = vmatpush.msra.mxu0 0.0
        %1000 = vmatpush.msra.mxu0 0.0
        %1001 = vmatpush.msra.mxu0 0.0
        %1002 = vmatpush.msra.mxu0 0.0
        %1003 = vmatpush.msra.mxu0 0.0
        %1004 = vmatpush.msra.mxu0 0.0
        %1005 = vmatpush.msra.mxu0 %v952
        %1006 = vmatpush.msra.mxu0 %v950
        %1007 = vmatpush.msra.mxu0 %v948
        %1008 = vmatpush.msra.mxu0 %v946
        %1009 = vmatpush.msra.mxu0 %v944
        %1010 = vmatpush.msra.mxu0 %v942
        %1011 = vmatmul.f32.gmra.mxu0 %v967
        %v1012 = vpop.f32.mrf.mxu0
        %v1013 = vadd.f32 %v958, %v1012
        %1014 = vmatmul.f32.gmra.mxu0 %v970
        %v1015 = vpop.f32.mrf.mxu0
        %v1016 = vadd.f32 %v963, %v1015
        %1017 = vdwg.mxu0
        %v1018 = vadd.f32 %v990, %v624
        %v1019 = vadd.f32 %v1013, %v653
        %v1020 = vadd.f32 %v993, %v627
        %v1021 = vadd.f32 %v1016, %v656
        %1022 = vst [vmem:[%s317] sm:$0xff] %v1018
        %1023 = vst [vmem:[%s317 + $0x8] sm:$0xff] %v1019
        %1024 = vst [vmem:[%s317 + $0x10] sm:$0xff] %v1020
        %1025 = vst [vmem:[%s317 + $0x18] sm:$0xff] %v1021
        %s1026 = sand.u32 %s208, 1
        %s1027 = scalar_lea.sflag [#allocation5], %s1026
        %s1028 = sand.u32 %s208, 1
        %s1029 = smul.addr %s1028, 32
        %s1030 = scalar_lea.vmem [#allocation4], %s1029
        // Predicated region
        $region53: #{tpu_custom_call.1} parent=51 // pred_check
          %p1031 = pneg %p218
        $region54: #{tpu_custom_call.1} parent=51 // pred_check_branch
          %1033 = sbr.rel (%p1031) target = $region56
        $region55: #{tpu_custom_call.1} parent=51 // pred_region
          %s1034 = smul.u32 2, %s22
          %1036 = vsyncadd %s1027, 0
          %s1037 = smul.addr %s1034, 8
          %s1038 = scalar_lea.hbm %s8, %s1037
          %s1039 = sshll.u32 %s1030, 4
          %s1040 = int_to_ptr.vmem [resolvable:$true] %s1039
          %s1041 = sshll.u32 %s1038, 4
          %s1042 = int_to_ptr.hbm [resolvable:$true] %s1041
          %1047 = dma.vmem_to_hbm [thread:$0]  %s1040, 512, %s1042, %s1027, 256, 512, 16
        $region56: #{tpu_custom_call.1} parent=51 // pred_fallthru
          _
      $region52: #{tpu_custom_call.1} parent=5 // pred_fallthru
        _
      %p1048 = scmp.le.s32.totalorder 2, %s17
      // Predicated region
      $region57: #{tpu_custom_call.1} parent=5 // pred_check
        %p1049 = pneg %p1048
      $region58: #{tpu_custom_call.1} parent=5 // pred_check_branch
        %1051 = sbr.rel (%p1049) target = $region60
      $region59: #{tpu_custom_call.1} parent=5 // pred_region
        %s1052 = ssub.s32 %s17, 2
        // Predicated region
        $region61: #{tpu_custom_call.1} parent=59 // pred_check
          %p1053 = pneg %p224
        $region62: #{tpu_custom_call.1} parent=59 // pred_check_branch
          %1055 = sbr.rel (%p1053) target = $region64
        $region63: #{tpu_custom_call.1} parent=59 // pred_region
          %s1056 = sand.u32 %s209, 1
          %s1057 = scalar_lea.sflag [#allocation5], %s1056
          %s1058 = sand.u32 %s209, 1
          %s1059 = smul.addr %s1058, 32
          %s1060 = scalar_lea.vmem [#allocation4], %s1059
          %1062 = dma.done %s1057, 512
        $region64: #{tpu_custom_call.1} parent=59 // pred_fallthru
          _
      $region60: #{tpu_custom_call.1} parent=5 // pred_fallthru
        _
    $region6: #{tpu_custom_call.1} parent=1 // loop_footer
      %s21 = sadd.s32 1, %s17
    $region7: #{tpu_custom_call.1} parent=1 // loop_footer_branch
      %16 = sbr.rel target = $region3
    $region8: #{tpu_custom_call.1} parent=1 // loop_exit
      _
    %1063 = vsyncpa [#allocation5], 1
    %s1064 = scalar_lea.sflag [#allocation5], 1
    %1065 = vsyncpa %s1064, 1

</llo_original>
